<compile_context>
chip_gen: v7x
topology: tpu7x:2x2x1
jax: 0.10.0
libtpu: 0.0.40
codegen_flags: <defaults>
</compile_context>

<pallas_src>
import functools

import jax
import jax.numpy as jnp
from jax import lax
from jax.experimental import pallas as pl
from jax.experimental.pallas import tpu as pltpu


def _pick_block(t, target=128):
    """Largest block <= target that divides t and is a multiple of 8 (else t)."""
    if t <= target:
        return t
    for cand in range(target, 0, -8):
        if t % cand == 0:
            return cand
    return t


def _mha_flash_kernel(xq_ref, xkv_ref, wq_ref, wk_ref, wv_ref, wo_ref, o_ref,
                      q_scr, m_scr, l_scr, acc_scr, *kv_cache,
                      num_heads, head_dim, blk, cache_kv):
    qi = pl.program_id(1)
    ki = pl.program_id(2)
    scale = 1.0 / (head_dim ** 0.5)

    # ---- first kv step for this (batch, q-block): project Q once, reset stats.
    @pl.when(ki == 0)
    def _init():
        xq = xq_ref[0]                                          # (blk, d_in) bf16
        q = jnp.dot(xq, wq_ref[...], preferred_element_type=jnp.float32)
        q_scr[...] = (q * scale).astype(q_scr.dtype)            # pre-scaled, bf16
        m_scr[...] = jnp.full_like(m_scr, -jnp.inf)
        l_scr[...] = jnp.zeros_like(l_scr)
        acc_scr[...] = jnp.zeros_like(acc_scr)

    # ---- causal block skipping: kv blocks entirely above the diagonal skipped.
    @pl.when(ki <= qi)
    def _compute():
        if cache_kv:
            k_cache_scr, v_cache_scr = kv_cache
            # Within a batch, kv block `ki` is first needed at qi == ki (the
            # diagonal step) -- project it there and cache it for later
            # q blocks of the same batch.
            @pl.when(ki == qi)
            def _fill():
                xkv = xkv_ref[0]                                # (blk, d_in) bf16
                kk = jnp.dot(xkv, wk_ref[...], preferred_element_type=jnp.float32)
                vv = jnp.dot(xkv, wv_ref[...], preferred_element_type=jnp.float32)
                off_w = pl.multiple_of(ki * blk, blk)
                k_cache_scr[pl.ds(off_w, blk), :] = kk.astype(k_cache_scr.dtype)
                v_cache_scr[pl.ds(off_w, blk), :] = vv.astype(v_cache_scr.dtype)

            off = pl.multiple_of(ki * blk, blk)
            k = k_cache_scr[pl.ds(off, blk), :]                 # (blk, d_out) bf16
            v = v_cache_scr[pl.ds(off, blk), :]
        else:
            xkv = xkv_ref[0]                                    # (blk, d_in) bf16
            k = jnp.dot(xkv, wk_ref[...],
                        preferred_element_type=jnp.float32).astype(jnp.bfloat16)
            v = jnp.dot(xkv, wv_ref[...],
                        preferred_element_type=jnp.float32).astype(jnp.bfloat16)

        row = qi * blk + lax.broadcasted_iota(jnp.int32, (blk, blk), 0)
        col = ki * blk + lax.broadcasted_iota(jnp.int32, (blk, blk), 1)
        causal = col <= row

        for h in range(num_heads):                              # static unroll
            sl = slice(h * head_dim, (h + 1) * head_dim)
            qh = q_scr[:, sl]                                   # (blk, hd) bf16
            kh = k[:, sl]
            vh = v[:, sl]

            # NT-form matmul: contract the last axis of both (no explicit .T).
            s = lax.dot_general(qh, kh, (((1,), (1,)), ((), ())),
                                preferred_element_type=jnp.float32)  # (blk, blk)
            s = jnp.where(causal, s, -jnp.inf)

            m_prev = m_scr[h]                                   # (blk, 1) f32
            m_new = jnp.maximum(m_prev, jnp.max(s, axis=-1, keepdims=True))
            alpha = jnp.exp(m_prev - m_new)
            p = jnp.exp(s - m_new)
            l_scr[h] = alpha * l_scr[h] + jnp.sum(p, axis=-1, keepdims=True)
            acc_scr[h] = alpha * acc_scr[h] + jnp.dot(
                p.astype(jnp.bfloat16), vh, preferred_element_type=jnp.float32)
            m_scr[h] = m_new

    # ---- the diagonal block is the last contributing kv block for this q
    #      block: normalize, stage the context in q_scr (Q is dead by now) and
    #      do the output projection as one full-width matmul.
    @pl.when(ki == qi)
    def _finalize():
        for h in range(num_heads):
            inv_l = pl.reciprocal(l_scr[h], approx=True)        # EUP slot (~free)
            q_scr[:, h * head_dim:(h + 1) * head_dim] = (
                acc_scr[h] * inv_l).astype(q_scr.dtype)
        o_ref[0] = jnp.dot(q_scr[...], wo_ref[...],
                           preferred_element_type=jnp.float32).astype(o_ref.dtype)


def mha_forward(x, wq, wk, wv, wo, *, num_heads, block=128,
                vmem_limit_bytes=48 * 1024 * 1024,
                kv_cache_budget_bytes=8 * 1024 * 1024):
    """x: (batch, num_tokens, d_in); weights stored (in_features, out_features)."""
    batch, num_tokens, d_in = x.shape
    d_out = wq.shape[1]
    assert d_out % num_heads == 0
    head_dim = d_out // num_heads

    blk = _pick_block(num_tokens, block)
    n_blocks = num_tokens // blk
    out_dtype = x.dtype

    # Cache projected K/V per batch when there is actual reuse and it fits.
    cache_bytes = 2 * num_tokens * d_out * 2                    # 2 bufs, bf16
    cache_kv = (n_blocks > 1) and (cache_bytes <= kv_cache_budget_bytes)

    # bf16 operands feed the MXU at full rate on v5e/v6e/v7x; accumulation f32.
    xb = x.astype(jnp.bfloat16)
    wqb, wkb, wvb, wob = (w.astype(jnp.bfloat16) for w in (wq, wk, wv, wo))

    kernel = functools.partial(_mha_flash_kernel, num_heads=num_heads,
                               head_dim=head_dim, blk=blk, cache_kv=cache_kv)

    def q_map(b, qi, ki):
        return (b, qi, 0)

    if cache_kv:
        # Only the diagonal block (== the q block) is ever projected; keep the
        # kv stream pinned to it so no extra DMA is issued across ki.
        kv_map = q_map
        dim_sem = ("parallel", "arbitrary", "arbitrary")
    else:
        def kv_map(b, qi, ki):
            # Blocks above the diagonal are skipped; clamp their index to the
            # diagonal block so no new DMA is issued for them.
            return (b, jnp.minimum(ki, qi), 0)
        dim_sem = ("parallel", "parallel", "arbitrary")

    const2d = lambda b, qi, ki: (0, 0)

    scratch_shapes = [
        pltpu.VMEM((blk, d_out), jnp.bfloat16),               # cached Q / ctx staging
        pltpu.VMEM((num_heads, blk, 1), jnp.float32),         # running max
        pltpu.VMEM((num_heads, blk, 1), jnp.float32),         # running denom
        pltpu.VMEM((num_heads, blk, head_dim), jnp.float32),  # unnormalized ctx
    ]
    if cache_kv:
        scratch_shapes += [pltpu.VMEM((num_tokens, d_out), jnp.bfloat16),  # K cache
                           pltpu.VMEM((num_tokens, d_out), jnp.bfloat16)]  # V cache

    return pl.pallas_call(
        kernel,
        out_shape=jax.ShapeDtypeStruct((batch, num_tokens, d_out), out_dtype),
        grid_spec=pltpu.PrefetchScalarGridSpec(
            num_scalar_prefetch=0,
            grid=(batch, n_blocks, n_blocks),
            in_specs=[
                pl.BlockSpec((1, blk, d_in), q_map),     # x for the q block
                pl.BlockSpec((1, blk, d_in), kv_map),    # x for the kv block
                pl.BlockSpec((d_in, d_out), const2d),    # wq (fetched once)
                pl.BlockSpec((d_in, d_out), const2d),    # wk
                pl.BlockSpec((d_in, d_out), const2d),    # wv
                pl.BlockSpec((d_out, d_out), const2d),   # wo
            ],
            out_specs=pl.BlockSpec((1, blk, d_out), q_map),
            scratch_shapes=scratch_shapes),
        compiler_params=pltpu.CompilerParams(
            dimension_semantics=dim_sem,
            vmem_limit_bytes=vmem_limit_bytes),
    )(xb, xb, wqb, wkb, wvb, wob)


def mha_reference(x, wq, wk, wv, wo, *, num_heads):
    """Pure-JAX fp32 reference mirroring the PyTorch forward (eval mode)."""
    b, t, _ = x.shape
    d_out = wq.shape[1]
    hd = d_out // num_heads
    q = (x @ wq).reshape(b, t, num_heads, hd).transpose(0, 2, 1, 3)
    k = (x @ wk).reshape(b, t, num_heads, hd).transpose(0, 2, 1, 3)
    v = (x @ wv).reshape(b, t, num_heads, hd).transpose(0, 2, 1, 3)
    s = jnp.einsum('bhqd,bhkd->bhqk', q, k)
    mask = jnp.triu(jnp.ones((t, t), dtype=bool), k=1)
    s = jnp.where(mask, -jnp.inf, s)
    w = jax.nn.softmax(s / (hd ** 0.5), axis=-1)
    ctx = jnp.einsum('bhqk,bhkd->bhqd', w, v).transpose(0, 2, 1, 3)
    return ctx.reshape(b, t, d_out) @ wo


if __name__ == "__main__":
    def make_case(key, batch, seq, d_in, d_out):
        kx, kq, kk, kv, ko = jax.random.split(key, 5)
        x = jax.random.normal(kx, (batch, seq, d_in), dtype=jnp.float32)
        wq = jax.random.normal(kq, (d_in, d_out), dtype=jnp.float32) * 0.1
        wk = jax.random.normal(kk, (d_in, d_out), dtype=jnp.float32) * 0.1
        wv = jax.random.normal(kv, (d_in, d_out), dtype=jnp.float32) * 0.1
        wo = jax.random.normal(ko, (d_out, d_out), dtype=jnp.float32) * 0.1
        return x, wq, wk, wv, wo

    k1, k2 = jax.random.split(jax.random.PRNGKey(0))

    # Case 1: module-consistent toy shapes (single block: full-extent tiles,
    # no K/V cache path).
    x, wq, wk, wv, wo = make_case(k1, batch=2, seq=8, d_in=32, d_out=32)
    out = jax.block_until_ready(mha_forward(x, wq, wk, wv, wo, num_heads=4))
    ref = mha_reference(x, wq, wk, wv, wo, num_heads=4)
    assert out.shape == ref.shape
    rel = jnp.linalg.norm(out - ref) / jnp.linalg.norm(ref)
    assert rel < 3e-2, f"case1 rel err {rel}"

    # Case 2: exercises flash tiling (2x2 q/kv blocks), causal block skipping,
    # online softmax across kv blocks, the K/V VMEM cache path, and a
    # lane-dense (128) output dim.
    x, wq, wk, wv, wo = make_case(k2, batch=2, seq=256, d_in=64, d_out=128)
    out = jax.block_until_ready(mha_forward(x, wq, wk, wv, wo, num_heads=2))
    ref = mha_reference(x, wq, wk, wv, wo, num_heads=2)
    rel = jnp.linalg.norm(out - ref) / jnp.linalg.norm(ref)
    assert rel < 3e-2, f"case2 rel err {rel}"

    print("KERNEL_OK")
</pallas_src>

<mosaic_0001>
module attributes {stable_mosaic.version = 11 : i64} {
  func.func @_mha_flash_kernel(%arg0: i32, %arg1: i32, %arg2: i32, %arg3: memref<1x8x32xbf16, #tpu.memory_space<vmem>>, %arg4: memref<1x8x32xbf16, #tpu.memory_space<vmem>>, %arg5: memref<32x32xbf16, #tpu.memory_space<vmem>>, %arg6: memref<32x32xbf16, #tpu.memory_space<vmem>>, %arg7: memref<32x32xbf16, #tpu.memory_space<vmem>>, %arg8: memref<32x32xbf16, #tpu.memory_space<vmem>>, %arg9: memref<1x8x32xf32, #tpu.memory_space<vmem>>, %arg10: memref<8x32xbf16, #tpu.memory_space<vmem>>, %arg11: memref<4x8x1xf32, #tpu.memory_space<vmem>>, %arg12: memref<4x8x1xf32, #tpu.memory_space<vmem>>, %arg13: memref<4x8x8xf32, #tpu.memory_space<vmem>>) attributes {dimension_semantics = [#tpu.dimension_semantics<parallel>, #tpu.dimension_semantics<parallel>, #tpu.dimension_semantics<arbitrary>], iteration_bounds = array<i64: 2, 1, 1>, scalar_prefetch = 0 : i64, scratch_operands = 4 : i64, tpu.core_type = #tpu.core_type<tc>, window_params = [{transform_indices = @transform_0, window_bounds = array<i64: 1, 8, 32>}, {transform_indices = @transform_1, window_bounds = array<i64: 1, 8, 32>}, {pipeline_mode = #tpu.pipeline_mode<synchronous>, transform_indices = @transform_2, window_bounds = array<i64: 32, 32>}, {pipeline_mode = #tpu.pipeline_mode<synchronous>, transform_indices = @transform_3, window_bounds = array<i64: 32, 32>}, {pipeline_mode = #tpu.pipeline_mode<synchronous>, transform_indices = @transform_4, window_bounds = array<i64: 32, 32>}, {pipeline_mode = #tpu.pipeline_mode<synchronous>, transform_indices = @transform_5, window_bounds = array<i64: 32, 32>}, {transform_indices = @transform_6, window_bounds = array<i64: 1, 8, 32>}]} {
    %c0_i32 = arith.constant 0 : i32
    %0 = arith.cmpi eq, %arg2, %c0_i32 : i32
    %1 = arith.extui %0 : i1 to i32
    %c0_i32_0 = arith.constant 0 : i32
    %2 = arith.cmpi ne, %1, %c0_i32_0 : i32
    scf.if %2 {
      %c0 = arith.constant 0 : index
      %c0_3 = arith.constant 0 : index
      %c0_4 = arith.constant 0 : index
      %9 = vector.load %arg3[%c0, %c0_3, %c0_4] : memref<1x8x32xbf16, #tpu.memory_space<vmem>>, vector<1x8x32xbf16>
      %10 = vector.shape_cast %9 : vector<1x8x32xbf16> to vector<8x32xbf16>
      %c0_5 = arith.constant 0 : index
      %c0_6 = arith.constant 0 : index
      %11 = vector.load %arg5[%c0_5, %c0_6] : memref<32x32xbf16, #tpu.memory_space<vmem>>, vector<32x32xbf16>
      %cst = arith.constant dense<0.000000e+00> : vector<8x32xf32>
      %12 = tpu.matmul %10, %11, %cst {dimension_numbers = #tpu.dot_dimension_numbers<[1], [0], [0], [1], [0, 0, 1, 1], [], []>} : vector<8x32xbf16>, vector<32x32xbf16>, vector<8x32xf32> -> vector<8x32xf32>
      %cst_7 = arith.constant 0.353553385 : f32
      %13 = vector.broadcast %cst_7 : f32 to vector<8x32xf32>
      %14 = arith.mulf %12, %13 : vector<8x32xf32>
      %15 = arith.truncf %14 : vector<8x32xf32> to vector<8x32xbf16>
      %c0_8 = arith.constant 0 : index
      %c0_9 = arith.constant 0 : index
      %16 = vector.load %arg10[%c0_8, %c0_9] : memref<8x32xbf16, #tpu.memory_space<vmem>>, vector<8x32xbf16>
      tpu.vector_store %arg10[%c0_8, %c0_9], %15 {strides = array<i32>} : memref<8x32xbf16, #tpu.memory_space<vmem>>, vector<8x32xbf16>,
      %cst_10 = arith.constant 0xFF800000 : f32
      %17 = vector.broadcast %cst_10 : f32 to vector<4x8x1xf32>
      %c0_11 = arith.constant 0 : index
      %c0_12 = arith.constant 0 : index
      %c0_13 = arith.constant 0 : index
      %18 = vector.load %arg11[%c0_11, %c0_12, %c0_13] : memref<4x8x1xf32, #tpu.memory_space<vmem>>, vector<4x8x1xf32>
      tpu.vector_store %arg11[%c0_11, %c0_12, %c0_13], %17 {strides = array<i32>} : memref<4x8x1xf32, #tpu.memory_space<vmem>>, vector<4x8x1xf32>,
      %cst_14 = arith.constant 0.000000e+00 : f32
      %19 = vector.broadcast %cst_14 : f32 to vector<4x8x1xf32>
      %c0_15 = arith.constant 0 : index
      %c0_16 = arith.constant 0 : index
      %c0_17 = arith.constant 0 : index
      %20 = vector.load %arg12[%c0_15, %c0_16, %c0_17] : memref<4x8x1xf32, #tpu.memory_space<vmem>>, vector<4x8x1xf32>
      tpu.vector_store %arg12[%c0_15, %c0_16, %c0_17], %19 {strides = array<i32>} : memref<4x8x1xf32, #tpu.memory_space<vmem>>, vector<4x8x1xf32>,
      %cst_18 = arith.constant 0.000000e+00 : f32
      %21 = vector.broadcast %cst_18 : f32 to vector<4x8x8xf32>
      %c0_19 = arith.constant 0 : index
      %c0_20 = arith.constant 0 : index
      %c0_21 = arith.constant 0 : index
      %22 = vector.load %arg13[%c0_19, %c0_20, %c0_21] : memref<4x8x8xf32, #tpu.memory_space<vmem>>, vector<4x8x8xf32>
      tpu.vector_store %arg13[%c0_19, %c0_20, %c0_21], %21 {strides = array<i32>} : memref<4x8x8xf32, #tpu.memory_space<vmem>>, vector<4x8x8xf32>,
    } else {
    }
    %3 = arith.cmpi sle, %arg2, %arg1 : i32
    %4 = arith.extui %3 : i1 to i32
    %c0_i32_1 = arith.constant 0 : i32
    %5 = arith.cmpi ne, %4, %c0_i32_1 : i32
    scf.if %5 {
      %c0 = arith.constant 0 : index
      %c0_3 = arith.constant 0 : index
      %c0_4 = arith.constant 0 : index
      %9 = vector.load %arg4[%c0, %c0_3, %c0_4] : memref<1x8x32xbf16, #tpu.memory_space<vmem>>, vector<1x8x32xbf16>
      %10 = vector.shape_cast %9 : vector<1x8x32xbf16> to vector<8x32xbf16>
      %c0_5 = arith.constant 0 : index
      %c0_6 = arith.constant 0 : index
      %11 = vector.load %arg6[%c0_5, %c0_6] : memref<32x32xbf16, #tpu.memory_space<vmem>>, vector<32x32xbf16>
      %cst = arith.constant dense<0.000000e+00> : vector<8x32xf32>
      %12 = tpu.matmul %10, %11, %cst {dimension_numbers = #tpu.dot_dimension_numbers<[1], [0], [0], [1], [0, 0, 1, 1], [], []>} : vector<8x32xbf16>, vector<32x32xbf16>, vector<8x32xf32> -> vector<8x32xf32>
      %13 = arith.truncf %12 : vector<8x32xf32> to vector<8x32xbf16>
      %c0_7 = arith.constant 0 : index
      %c0_8 = arith.constant 0 : index
      %14 = vector.load %arg7[%c0_7, %c0_8] : memref<32x32xbf16, #tpu.memory_space<vmem>>, vector<32x32xbf16>
      %cst_9 = arith.constant dense<0.000000e+00> : vector<8x32xf32>
      %15 = tpu.matmul %10, %14, %cst_9 {dimension_numbers = #tpu.dot_dimension_numbers<[1], [0], [0], [1], [0, 0, 1, 1], [], []>} : vector<8x32xbf16>, vector<32x32xbf16>, vector<8x32xf32> -> vector<8x32xf32>
      %16 = arith.truncf %15 : vector<8x32xf32> to vector<8x32xbf16>
      %c8_i32 = arith.constant 8 : i32
      %17 = arith.muli %arg1, %c8_i32 : i32
      %18 = tpu.iota {dimensions = array<i32: 0>} : vector<8x8xi32>
      %19 = vector.broadcast %17 : i32 to vector<8x8xi32>
      %20 = arith.addi %19, %18 : vector<8x8xi32>
      %c8_i32_10 = arith.constant 8 : i32
      %21 = arith.muli %arg2, %c8_i32_10 : i32
      %22 = tpu.iota {dimensions = array<i32: 1>} : vector<8x8xi32>
      %23 = vector.broadcast %21 : i32 to vector<8x8xi32>
      %24 = arith.addi %23, %22 : vector<8x8xi32>
      %25 = arith.cmpi sle, %24, %20 : vector<8x8xi32>
      %c0_11 = arith.constant 0 : index
      %c0_12 = arith.constant 0 : index
      %26 = vector.load %arg10[%c0_11, %c0_12] : memref<8x32xbf16, #tpu.memory_space<vmem>>, vector<8x8xbf16>
      %27 = vector.extract_strided_slice %13 {offsets = [0, 0], sizes = [8, 8], strides = [1, 1]} : vector<8x32xbf16> to vector<8x8xbf16>
      %28 = vector.extract_strided_slice %16 {offsets = [0, 0], sizes = [8, 8], strides = [1, 1]} : vector<8x32xbf16> to vector<8x8xbf16>
      %cst_13 = arith.constant dense<0.000000e+00> : vector<8x8xf32>
      %29 = tpu.matmul %26, %27, %cst_13 {dimension_numbers = #tpu.dot_dimension_numbers<[1], [1], [0], [0], [0, 0, 1, 0], [], []>} : vector<8x8xbf16>, vector<8x8xbf16>, vector<8x8xf32> -> vector<8x8xf32>
      %cst_14 = arith.constant 0xFF800000 : f32
      %30 = vector.broadcast %cst_14 : f32 to vector<8x8xf32>
      %31 = arith.select %25, %29, %30 : vector<8x8xi1>, vector<8x8xf32>
      %c0_15 = arith.constant 0 : index
      %c0_16 = arith.constant 0 : index
      %c0_17 = arith.constant 0 : index
      %32 = vector.load %arg11[%c0_15, %c0_16, %c0_17] : memref<4x8x1xf32, #tpu.memory_space<vmem>>, vector<1x8x1xf32>
      %33 = vector.shape_cast %32 : vector<1x8x1xf32> to vector<8x1xf32>
      %cst_18 = arith.constant dense<0xFF800000> : vector<8xf32>
      %34 = vector.multi_reduction <maximumf>, %31, %cst_18 [1] : vector<8x8xf32> to vector<8xf32>
      %35 = vector.shape_cast %34 : vector<8xf32> to vector<8x1xf32>
      %36 = arith.maximumf %33, %35 : vector<8x1xf32>
      %37 = arith.subf %33, %36 : vector<8x1xf32>
      %38 = math.exp %37 : vector<8x1xf32>
      %39 = vector.broadcast %36 : vector<8x1xf32> to vector<8x8xf32>
      %40 = arith.subf %31, %39 : vector<8x8xf32>
      %41 = math.exp %40 : vector<8x8xf32>
      %c0_19 = arith.constant 0 : index
      %c0_20 = arith.constant 0 : index
      %c0_21 = arith.constant 0 : index
      %42 = vector.load %arg12[%c0_19, %c0_20, %c0_21] : memref<4x8x1xf32, #tpu.memory_space<vmem>>, vector<1x8x1xf32>
      %43 = vector.shape_cast %42 : vector<1x8x1xf32> to vector<8x1xf32>
      %44 = arith.mulf %38, %43 : vector<8x1xf32>
      %cst_22 = arith.constant dense<0.000000e+00> : vector<8xf32>
      %45 = vector.multi_reduction <add>, %41, %cst_22 [1] : vector<8x8xf32> to vector<8xf32>
      %46 = vector.shape_cast %45 : vector<8xf32> to vector<8x1xf32>
      %47 = arith.addf %44, %46 : vector<8x1xf32>
      %c0_23 = arith.constant 0 : index
      %c0_24 = arith.constant 0 : index
      %c0_25 = arith.constant 0 : index
      %48 = vector.load %arg12[%c0_23, %c0_24, %c0_25] : memref<4x8x1xf32, #tpu.memory_space<vmem>>, vector<1x8x1xf32>
      %49 = vector.shape_cast %48 : vector<1x8x1xf32> to vector<8x1xf32>
      %50 = vector.shape_cast %47 : vector<8x1xf32> to vector<1x8x1xf32>
      tpu.vector_store %arg12[%c0_23, %c0_24, %c0_25], %50 {strides = array<i32>} : memref<4x8x1xf32, #tpu.memory_space<vmem>>, vector<1x8x1xf32>,
      %c0_26 = arith.constant 0 : index
      %c0_27 = arith.constant 0 : index
      %c0_28 = arith.constant 0 : index
      %51 = vector.load %arg13[%c0_26, %c0_27, %c0_28] : memref<4x8x8xf32, #tpu.memory_space<vmem>>, vector<1x8x8xf32>
      %52 = vector.shape_cast %51 : vector<1x8x8xf32> to vector<8x8xf32>
      %53 = vector.broadcast %38 : vector<8x1xf32> to vector<8x8xf32>
      %54 = arith.mulf %53, %52 : vector<8x8xf32>
      %55 = arith.truncf %41 : vector<8x8xf32> to vector<8x8xbf16>
      %cst_29 = arith.constant dense<0.000000e+00> : vector<8x8xf32>
      %56 = tpu.matmul %55, %28, %cst_29 {dimension_numbers = #tpu.dot_dimension_numbers<[1], [0], [0], [1], [0, 0, 1, 1], [], []>} : vector<8x8xbf16>, vector<8x8xbf16>, vector<8x8xf32> -> vector<8x8xf32>
      %57 = arith.addf %54, %56 : vector<8x8xf32>
      %c0_30 = arith.constant 0 : index
      %c0_31 = arith.constant 0 : index
      %c0_32 = arith.constant 0 : index
      %58 = vector.load %arg13[%c0_30, %c0_31, %c0_32] : memref<4x8x8xf32, #tpu.memory_space<vmem>>, vector<1x8x8xf32>
      %59 = vector.shape_cast %58 : vector<1x8x8xf32> to vector<8x8xf32>
      %60 = vector.shape_cast %57 : vector<8x8xf32> to vector<1x8x8xf32>
      tpu.vector_store %arg13[%c0_30, %c0_31, %c0_32], %60 {strides = array<i32>} : memref<4x8x8xf32, #tpu.memory_space<vmem>>, vector<1x8x8xf32>,
      %c0_33 = arith.constant 0 : index
      %c0_34 = arith.constant 0 : index
      %c0_35 = arith.constant 0 : index
      %61 = vector.load %arg11[%c0_33, %c0_34, %c0_35] : memref<4x8x1xf32, #tpu.memory_space<vmem>>, vector<1x8x1xf32>
      %62 = vector.shape_cast %61 : vector<1x8x1xf32> to vector<8x1xf32>
      %63 = vector.shape_cast %36 : vector<8x1xf32> to vector<1x8x1xf32>
      tpu.vector_store %arg11[%c0_33, %c0_34, %c0_35], %63 {strides = array<i32>} : memref<4x8x1xf32, #tpu.memory_space<vmem>>, vector<1x8x1xf32>,
      %c0_36 = arith.constant 0 : index
      %c8 = arith.constant 8 : index
      %64 = vector.load %arg10[%c0_36, %c8] : memref<8x32xbf16, #tpu.memory_space<vmem>>, vector<8x8xbf16>
      %65 = vector.extract_strided_slice %13 {offsets = [0, 8], sizes = [8, 8], strides = [1, 1]} : vector<8x32xbf16> to vector<8x8xbf16>
      %66 = vector.extract_strided_slice %16 {offsets = [0, 8], sizes = [8, 8], strides = [1, 1]} : vector<8x32xbf16> to vector<8x8xbf16>
      %cst_37 = arith.constant dense<0.000000e+00> : vector<8x8xf32>
      %67 = tpu.matmul %64, %65, %cst_37 {dimension_numbers = #tpu.dot_dimension_numbers<[1], [1], [0], [0], [0, 0, 1, 0], [], []>} : vector<8x8xbf16>, vector<8x8xbf16>, vector<8x8xf32> -> vector<8x8xf32>
      %cst_38 = arith.constant 0xFF800000 : f32
      %68 = vector.broadcast %cst_38 : f32 to vector<8x8xf32>
      %69 = arith.select %25, %67, %68 : vector<8x8xi1>, vector<8x8xf32>
      %c1 = arith.constant 1 : index
      %c0_39 = arith.constant 0 : index
      %c0_40 = arith.constant 0 : index
      %70 = vector.load %arg11[%c1, %c0_39, %c0_40] : memref<4x8x1xf32, #tpu.memory_space<vmem>>, vector<1x8x1xf32>
      %71 = vector.shape_cast %70 : vector<1x8x1xf32> to vector<8x1xf32>
      %cst_41 = arith.constant dense<0xFF800000> : vector<8xf32>
      %72 = vector.multi_reduction <maximumf>, %69, %cst_41 [1] : vector<8x8xf32> to vector<8xf32>
      %73 = vector.shape_cast %72 : vector<8xf32> to vector<8x1xf32>
      %74 = arith.maximumf %71, %73 : vector<8x1xf32>
      %75 = arith.subf %71, %74 : vector<8x1xf32>
      %76 = math.exp %75 : vector<8x1xf32>
      %77 = vector.broadcast %74 : vector<8x1xf32> to vector<8x8xf32>
      %78 = arith.subf %69, %77 : vector<8x8xf32>
      %79 = math.exp %78 : vector<8x8xf32>
      %c1_42 = arith.constant 1 : index
      %c0_43 = arith.constant 0 : index
      %c0_44 = arith.constant 0 : index
      %80 = vector.load %arg12[%c1_42, %c0_43, %c0_44] : memref<4x8x1xf32, #tpu.memory_space<vmem>>, vector<1x8x1xf32>
      %81 = vector.shape_cast %80 : vector<1x8x1xf32> to vector<8x1xf32>
      %82 = arith.mulf %76, %81 : vector<8x1xf32>
      %cst_45 = arith.constant dense<0.000000e+00> : vector<8xf32>
      %83 = vector.multi_reduction <add>, %79, %cst_45 [1] : vector<8x8xf32> to vector<8xf32>
      %84 = vector.shape_cast %83 : vector<8xf32> to vector<8x1xf32>
      %85 = arith.addf %82, %84 : vector<8x1xf32>
      %c1_46 = arith.constant 1 : index
      %c0_47 = arith.constant 0 : index
      %c0_48 = arith.constant 0 : index
      %86 = vector.load %arg12[%c1_46, %c0_47, %c0_48] : memref<4x8x1xf32, #tpu.memory_space<vmem>>, vector<1x8x1xf32>
      %87 = vector.shape_cast %86 : vector<1x8x1xf32> to vector<8x1xf32>
      %88 = vector.shape_cast %85 : vector<8x1xf32> to vector<1x8x1xf32>
      tpu.vector_store %arg12[%c1_46, %c0_47, %c0_48], %88 {strides = array<i32>} : memref<4x8x1xf32, #tpu.memory_space<vmem>>, vector<1x8x1xf32>,
      %c1_49 = arith.constant 1 : index
      %c0_50 = arith.constant 0 : index
      %c0_51 = arith.constant 0 : index
      %89 = vector.load %arg13[%c1_49, %c0_50, %c0_51] : memref<4x8x8xf32, #tpu.memory_space<vmem>>, vector<1x8x8xf32>
      %90 = vector.shape_cast %89 : vector<1x8x8xf32> to vector<8x8xf32>
      %91 = vector.broadcast %76 : vector<8x1xf32> to vector<8x8xf32>
      %92 = arith.mulf %91, %90 : vector<8x8xf32>
      %93 = arith.truncf %79 : vector<8x8xf32> to vector<8x8xbf16>
      %cst_52 = arith.constant dense<0.000000e+00> : vector<8x8xf32>
      %94 = tpu.matmul %93, %66, %cst_52 {dimension_numbers = #tpu.dot_dimension_numbers<[1], [0], [0], [1], [0, 0, 1, 1], [], []>} : vector<8x8xbf16>, vector<8x8xbf16>, vector<8x8xf32> -> vector<8x8xf32>
      %95 = arith.addf %92, %94 : vector<8x8xf32>
      %c1_53 = arith.constant 1 : index
      %c0_54 = arith.constant 0 : index
      %c0_55 = arith.constant 0 : index
      %96 = vector.load %arg13[%c1_53, %c0_54, %c0_55] : memref<4x8x8xf32, #tpu.memory_space<vmem>>, vector<1x8x8xf32>
      %97 = vector.shape_cast %96 : vector<1x8x8xf32> to vector<8x8xf32>
      %98 = vector.shape_cast %95 : vector<8x8xf32> to vector<1x8x8xf32>
      tpu.vector_store %arg13[%c1_53, %c0_54, %c0_55], %98 {strides = array<i32>} : memref<4x8x8xf32, #tpu.memory_space<vmem>>, vector<1x8x8xf32>,
      %c1_56 = arith.constant 1 : index
      %c0_57 = arith.constant 0 : index
      %c0_58 = arith.constant 0 : index
      %99 = vector.load %arg11[%c1_56, %c0_57, %c0_58] : memref<4x8x1xf32, #tpu.memory_space<vmem>>, vector<1x8x1xf32>
      %100 = vector.shape_cast %99 : vector<1x8x1xf32> to vector<8x1xf32>
      %101 = vector.shape_cast %74 : vector<8x1xf32> to vector<1x8x1xf32>
      tpu.vector_store %arg11[%c1_56, %c0_57, %c0_58], %101 {strides = array<i32>} : memref<4x8x1xf32, #tpu.memory_space<vmem>>, vector<1x8x1xf32>,
      %c0_59 = arith.constant 0 : index
      %c16 = arith.constant 16 : index
      %102 = vector.load %arg10[%c0_59, %c16] : memref<8x32xbf16, #tpu.memory_space<vmem>>, vector<8x8xbf16>
      %103 = vector.extract_strided_slice %13 {offsets = [0, 16], sizes = [8, 8], strides = [1, 1]} : vector<8x32xbf16> to vector<8x8xbf16>
      %104 = vector.extract_strided_slice %16 {offsets = [0, 16], sizes = [8, 8], strides = [1, 1]} : vector<8x32xbf16> to vector<8x8xbf16>
      %cst_60 = arith.constant dense<0.000000e+00> : vector<8x8xf32>
      %105 = tpu.matmul %102, %103, %cst_60 {dimension_numbers = #tpu.dot_dimension_numbers<[1], [1], [0], [0], [0, 0, 1, 0], [], []>} : vector<8x8xbf16>, vector<8x8xbf16>, vector<8x8xf32> -> vector<8x8xf32>
      %cst_61 = arith.constant 0xFF800000 : f32
      %106 = vector.broadcast %cst_61 : f32 to vector<8x8xf32>
      %107 = arith.select %25, %105, %106 : vector<8x8xi1>, vector<8x8xf32>
      %c2 = arith.constant 2 : index
      %c0_62 = arith.constant 0 : index
      %c0_63 = arith.constant 0 : index
      %108 = vector.load %arg11[%c2, %c0_62, %c0_63] : memref<4x8x1xf32, #tpu.memory_space<vmem>>, vector<1x8x1xf32>
      %109 = vector.shape_cast %108 : vector<1x8x1xf32> to vector<8x1xf32>
      %cst_64 = arith.constant dense<0xFF800000> : vector<8xf32>
      %110 = vector.multi_reduction <maximumf>, %107, %cst_64 [1] : vector<8x8xf32> to vector<8xf32>
      %111 = vector.shape_cast %110 : vector<8xf32> to vector<8x1xf32>
      %112 = arith.maximumf %109, %111 : vector<8x1xf32>
      %113 = arith.subf %109, %112 : vector<8x1xf32>
      %114 = math.exp %113 : vector<8x1xf32>
      %115 = vector.broadcast %112 : vector<8x1xf32> to vector<8x8xf32>
      %116 = arith.subf %107, %115 : vector<8x8xf32>
      %117 = math.exp %116 : vector<8x8xf32>
      %c2_65 = arith.constant 2 : index
      %c0_66 = arith.constant 0 : index
      %c0_67 = arith.constant 0 : index
      %118 = vector.load %arg12[%c2_65, %c0_66, %c0_67] : memref<4x8x1xf32, #tpu.memory_space<vmem>>, vector<1x8x1xf32>
      %119 = vector.shape_cast %118 : vector<1x8x1xf32> to vector<8x1xf32>
      %120 = arith.mulf %114, %119 : vector<8x1xf32>
      %cst_68 = arith.constant dense<0.000000e+00> : vector<8xf32>
      %121 = vector.multi_reduction <add>, %117, %cst_68 [1] : vector<8x8xf32> to vector<8xf32>
      %122 = vector.shape_cast %121 : vector<8xf32> to vector<8x1xf32>
      %123 = arith.addf %120, %122 : vector<8x1xf32>
      %c2_69 = arith.constant 2 : index
      %c0_70 = arith.constant 0 : index
      %c0_71 = arith.constant 0 : index
      %124 = vector.load %arg12[%c2_69, %c0_70, %c0_71] : memref<4x8x1xf32, #tpu.memory_space<vmem>>, vector<1x8x1xf32>
      %125 = vector.shape_cast %124 : vector<1x8x1xf32> to vector<8x1xf32>
      %126 = vector.shape_cast %123 : vector<8x1xf32> to vector<1x8x1xf32>
      tpu.vector_store %arg12[%c2_69, %c0_70, %c0_71], %126 {strides = array<i32>} : memref<4x8x1xf32, #tpu.memory_space<vmem>>, vector<1x8x1xf32>,
      %c2_72 = arith.constant 2 : index
      %c0_73 = arith.constant 0 : index
      %c0_74 = arith.constant 0 : index
      %127 = vector.load %arg13[%c2_72, %c0_73, %c0_74] : memref<4x8x8xf32, #tpu.memory_space<vmem>>, vector<1x8x8xf32>
      %128 = vector.shape_cast %127 : vector<1x8x8xf32> to vector<8x8xf32>
      %129 = vector.broadcast %114 : vector<8x1xf32> to vector<8x8xf32>
      %130 = arith.mulf %129, %128 : vector<8x8xf32>
      %131 = arith.truncf %117 : vector<8x8xf32> to vector<8x8xbf16>
      %cst_75 = arith.constant dense<0.000000e+00> : vector<8x8xf32>
      %132 = tpu.matmul %131, %104, %cst_75 {dimension_numbers = #tpu.dot_dimension_numbers<[1], [0], [0], [1], [0, 0, 1, 1], [], []>} : vector<8x8xbf16>, vector<8x8xbf16>, vector<8x8xf32> -> vector<8x8xf32>
      %133 = arith.addf %130, %132 : vector<8x8xf32>
      %c2_76 = arith.constant 2 : index
      %c0_77 = arith.constant 0 : index
      %c0_78 = arith.constant 0 : index
      %134 = vector.load %arg13[%c2_76, %c0_77, %c0_78] : memref<4x8x8xf32, #tpu.memory_space<vmem>>, vector<1x8x8xf32>
      %135 = vector.shape_cast %134 : vector<1x8x8xf32> to vector<8x8xf32>
      %136 = vector.shape_cast %133 : vector<8x8xf32> to vector<1x8x8xf32>
      tpu.vector_store %arg13[%c2_76, %c0_77, %c0_78], %136 {strides = array<i32>} : memref<4x8x8xf32, #tpu.memory_space<vmem>>, vector<1x8x8xf32>,
      %c2_79 = arith.constant 2 : index
      %c0_80 = arith.constant 0 : index
      %c0_81 = arith.constant 0 : index
      %137 = vector.load %arg11[%c2_79, %c0_80, %c0_81] : memref<4x8x1xf32, #tpu.memory_space<vmem>>, vector<1x8x1xf32>
      %138 = vector.shape_cast %137 : vector<1x8x1xf32> to vector<8x1xf32>
      %139 = vector.shape_cast %112 : vector<8x1xf32> to vector<1x8x1xf32>
      tpu.vector_store %arg11[%c2_79, %c0_80, %c0_81], %139 {strides = array<i32>} : memref<4x8x1xf32, #tpu.memory_space<vmem>>, vector<1x8x1xf32>,
      %c0_82 = arith.constant 0 : index
      %c24 = arith.constant 24 : index
      %140 = vector.load %arg10[%c0_82, %c24] : memref<8x32xbf16, #tpu.memory_space<vmem>>, vector<8x8xbf16>
      %141 = vector.extract_strided_slice %13 {offsets = [0, 24], sizes = [8, 8], strides = [1, 1]} : vector<8x32xbf16> to vector<8x8xbf16>
      %142 = vector.extract_strided_slice %16 {offsets = [0, 24], sizes = [8, 8], strides = [1, 1]} : vector<8x32xbf16> to vector<8x8xbf16>
      %cst_83 = arith.constant dense<0.000000e+00> : vector<8x8xf32>
      %143 = tpu.matmul %140, %141, %cst_83 {dimension_numbers = #tpu.dot_dimension_numbers<[1], [1], [0], [0], [0, 0, 1, 0], [], []>} : vector<8x8xbf16>, vector<8x8xbf16>, vector<8x8xf32> -> vector<8x8xf32>
      %cst_84 = arith.constant 0xFF800000 : f32
      %144 = vector.broadcast %cst_84 : f32 to vector<8x8xf32>
      %145 = arith.select %25, %143, %144 : vector<8x8xi1>, vector<8x8xf32>
      %c3 = arith.constant 3 : index
      %c0_85 = arith.constant 0 : index
      %c0_86 = arith.constant 0 : index
      %146 = vector.load %arg11[%c3, %c0_85, %c0_86] : memref<4x8x1xf32, #tpu.memory_space<vmem>>, vector<1x8x1xf32>
      %147 = vector.shape_cast %146 : vector<1x8x1xf32> to vector<8x1xf32>
      %cst_87 = arith.constant dense<0xFF800000> : vector<8xf32>
      %148 = vector.multi_reduction <maximumf>, %145, %cst_87 [1] : vector<8x8xf32> to vector<8xf32>
      %149 = vector.shape_cast %148 : vector<8xf32> to vector<8x1xf32>
      %150 = arith.maximumf %147, %149 : vector<8x1xf32>
      %151 = arith.subf %147, %150 : vector<8x1xf32>
      %152 = math.exp %151 : vector<8x1xf32>
      %153 = vector.broadcast %150 : vector<8x1xf32> to vector<8x8xf32>
      %154 = arith.subf %145, %153 : vector<8x8xf32>
      %155 = math.exp %154 : vector<8x8xf32>
      %c3_88 = arith.constant 3 : index
      %c0_89 = arith.constant 0 : index
      %c0_90 = arith.constant 0 : index
      %156 = vector.load %arg12[%c3_88, %c0_89, %c0_90] : memref<4x8x1xf32, #tpu.memory_space<vmem>>, vector<1x8x1xf32>
      %157 = vector.shape_cast %156 : vector<1x8x1xf32> to vector<8x1xf32>
      %158 = arith.mulf %152, %157 : vector<8x1xf32>
      %cst_91 = arith.constant dense<0.000000e+00> : vector<8xf32>
      %159 = vector.multi_reduction <add>, %155, %cst_91 [1] : vector<8x8xf32> to vector<8xf32>
      %160 = vector.shape_cast %159 : vector<8xf32> to vector<8x1xf32>
      %161 = arith.addf %158, %160 : vector<8x1xf32>
      %c3_92 = arith.constant 3 : index
      %c0_93 = arith.constant 0 : index
      %c0_94 = arith.constant 0 : index
      %162 = vector.load %arg12[%c3_92, %c0_93, %c0_94] : memref<4x8x1xf32, #tpu.memory_space<vmem>>, vector<1x8x1xf32>
      %163 = vector.shape_cast %162 : vector<1x8x1xf32> to vector<8x1xf32>
      %164 = vector.shape_cast %161 : vector<8x1xf32> to vector<1x8x1xf32>
      tpu.vector_store %arg12[%c3_92, %c0_93, %c0_94], %164 {strides = array<i32>} : memref<4x8x1xf32, #tpu.memory_space<vmem>>, vector<1x8x1xf32>,
      %c3_95 = arith.constant 3 : index
      %c0_96 = arith.constant 0 : index
      %c0_97 = arith.constant 0 : index
      %165 = vector.load %arg13[%c3_95, %c0_96, %c0_97] : memref<4x8x8xf32, #tpu.memory_space<vmem>>, vector<1x8x8xf32>
      %166 = vector.shape_cast %165 : vector<1x8x8xf32> to vector<8x8xf32>
      %167 = vector.broadcast %152 : vector<8x1xf32> to vector<8x8xf32>
      %168 = arith.mulf %167, %166 : vector<8x8xf32>
      %169 = arith.truncf %155 : vector<8x8xf32> to vector<8x8xbf16>
      %cst_98 = arith.constant dense<0.000000e+00> : vector<8x8xf32>
      %170 = tpu.matmul %169, %142, %cst_98 {dimension_numbers = #tpu.dot_dimension_numbers<[1], [0], [0], [1], [0, 0, 1, 1], [], []>} : vector<8x8xbf16>, vector<8x8xbf16>, vector<8x8xf32> -> vector<8x8xf32>
      %171 = arith.addf %168, %170 : vector<8x8xf32>
      %c3_99 = arith.constant 3 : index
      %c0_100 = arith.constant 0 : index
      %c0_101 = arith.constant 0 : index
      %172 = vector.load %arg13[%c3_99, %c0_100, %c0_101] : memref<4x8x8xf32, #tpu.memory_space<vmem>>, vector<1x8x8xf32>
      %173 = vector.shape_cast %172 : vector<1x8x8xf32> to vector<8x8xf32>
      %174 = vector.shape_cast %171 : vector<8x8xf32> to vector<1x8x8xf32>
      tpu.vector_store %arg13[%c3_99, %c0_100, %c0_101], %174 {strides = array<i32>} : memref<4x8x8xf32, #tpu.memory_space<vmem>>, vector<1x8x8xf32>,
      %c3_102 = arith.constant 3 : index
      %c0_103 = arith.constant 0 : index
      %c0_104 = arith.constant 0 : index
      %175 = vector.load %arg11[%c3_102, %c0_103, %c0_104] : memref<4x8x1xf32, #tpu.memory_space<vmem>>, vector<1x8x1xf32>
      %176 = vector.shape_cast %175 : vector<1x8x1xf32> to vector<8x1xf32>
      %177 = vector.shape_cast %150 : vector<8x1xf32> to vector<1x8x1xf32>
      tpu.vector_store %arg11[%c3_102, %c0_103, %c0_104], %177 {strides = array<i32>} : memref<4x8x1xf32, #tpu.memory_space<vmem>>, vector<1x8x1xf32>,
    } else {
    }
    %6 = arith.cmpi eq, %arg2, %arg1 : i32
    %7 = arith.extui %6 : i1 to i32
    %c0_i32_2 = arith.constant 0 : i32
    %8 = arith.cmpi ne, %7, %c0_i32_2 : i32
    scf.if %8 {
      %c0 = arith.constant 0 : index
      %c0_3 = arith.constant 0 : index
      %c0_4 = arith.constant 0 : index
      %9 = vector.load %arg12[%c0, %c0_3, %c0_4] : memref<4x8x1xf32, #tpu.memory_space<vmem>>, vector<1x8x1xf32>
      %10 = vector.shape_cast %9 : vector<1x8x1xf32> to vector<8x1xf32>
      %11 = tpu.reciprocal %10 {approx = true} : vector<8x1xf32> -> vector<8x1xf32>
      %c0_5 = arith.constant 0 : index
      %c0_6 = arith.constant 0 : index
      %c0_7 = arith.constant 0 : index
      %12 = vector.load %arg13[%c0_5, %c0_6, %c0_7] : memref<4x8x8xf32, #tpu.memory_space<vmem>>, vector<1x8x8xf32>
      %13 = vector.shape_cast %12 : vector<1x8x8xf32> to vector<8x8xf32>
      %14 = vector.broadcast %11 : vector<8x1xf32> to vector<8x8xf32>
      %15 = arith.mulf %13, %14 : vector<8x8xf32>
      %16 = arith.truncf %15 : vector<8x8xf32> to vector<8x8xbf16>
      %c0_8 = arith.constant 0 : index
      %c0_9 = arith.constant 0 : index
      %17 = vector.load %arg10[%c0_8, %c0_9] : memref<8x32xbf16, #tpu.memory_space<vmem>>, vector<8x8xbf16>
      tpu.vector_store %arg10[%c0_8, %c0_9], %16 {strides = array<i32>} : memref<8x32xbf16, #tpu.memory_space<vmem>>, vector<8x8xbf16>,
      %c1 = arith.constant 1 : index
      %c0_10 = arith.constant 0 : index
      %c0_11 = arith.constant 0 : index
      %18 = vector.load %arg12[%c1, %c0_10, %c0_11] : memref<4x8x1xf32, #tpu.memory_space<vmem>>, vector<1x8x1xf32>
      %19 = vector.shape_cast %18 : vector<1x8x1xf32> to vector<8x1xf32>
      %20 = tpu.reciprocal %19 {approx = true} : vector<8x1xf32> -> vector<8x1xf32>
      %c1_12 = arith.constant 1 : index
      %c0_13 = arith.constant 0 : index
      %c0_14 = arith.constant 0 : index
      %21 = vector.load %arg13[%c1_12, %c0_13, %c0_14] : memref<4x8x8xf32, #tpu.memory_space<vmem>>, vector<1x8x8xf32>
      %22 = vector.shape_cast %21 : vector<1x8x8xf32> to vector<8x8xf32>
      %23 = vector.broadcast %20 : vector<8x1xf32> to vector<8x8xf32>
      %24 = arith.mulf %22, %23 : vector<8x8xf32>
      %25 = arith.truncf %24 : vector<8x8xf32> to vector<8x8xbf16>
      %c0_15 = arith.constant 0 : index
      %c8 = arith.constant 8 : index
      %26 = vector.load %arg10[%c0_15, %c8] : memref<8x32xbf16, #tpu.memory_space<vmem>>, vector<8x8xbf16>
      tpu.vector_store %arg10[%c0_15, %c8], %25 {strides = array<i32>} : memref<8x32xbf16, #tpu.memory_space<vmem>>, vector<8x8xbf16>,
      %c2 = arith.constant 2 : index
      %c0_16 = arith.constant 0 : index
      %c0_17 = arith.constant 0 : index
      %27 = vector.load %arg12[%c2, %c0_16, %c0_17] : memref<4x8x1xf32, #tpu.memory_space<vmem>>, vector<1x8x1xf32>
      %28 = vector.shape_cast %27 : vector<1x8x1xf32> to vector<8x1xf32>
      %29 = tpu.reciprocal %28 {approx = true} : vector<8x1xf32> -> vector<8x1xf32>
      %c2_18 = arith.constant 2 : index
      %c0_19 = arith.constant 0 : index
      %c0_20 = arith.constant 0 : index
      %30 = vector.load %arg13[%c2_18, %c0_19, %c0_20] : memref<4x8x8xf32, #tpu.memory_space<vmem>>, vector<1x8x8xf32>
      %31 = vector.shape_cast %30 : vector<1x8x8xf32> to vector<8x8xf32>
      %32 = vector.broadcast %29 : vector<8x1xf32> to vector<8x8xf32>
      %33 = arith.mulf %31, %32 : vector<8x8xf32>
      %34 = arith.truncf %33 : vector<8x8xf32> to vector<8x8xbf16>
      %c0_21 = arith.constant 0 : index
      %c16 = arith.constant 16 : index
      %35 = vector.load %arg10[%c0_21, %c16] : memref<8x32xbf16, #tpu.memory_space<vmem>>, vector<8x8xbf16>
      tpu.vector_store %arg10[%c0_21, %c16], %34 {strides = array<i32>} : memref<8x32xbf16, #tpu.memory_space<vmem>>, vector<8x8xbf16>,
      %c3 = arith.constant 3 : index
      %c0_22 = arith.constant 0 : index
      %c0_23 = arith.constant 0 : index
      %36 = vector.load %arg12[%c3, %c0_22, %c0_23] : memref<4x8x1xf32, #tpu.memory_space<vmem>>, vector<1x8x1xf32>
      %37 = vector.shape_cast %36 : vector<1x8x1xf32> to vector<8x1xf32>
      %38 = tpu.reciprocal %37 {approx = true} : vector<8x1xf32> -> vector<8x1xf32>
      %c3_24 = arith.constant 3 : index
      %c0_25 = arith.constant 0 : index
      %c0_26 = arith.constant 0 : index
      %39 = vector.load %arg13[%c3_24, %c0_25, %c0_26] : memref<4x8x8xf32, #tpu.memory_space<vmem>>, vector<1x8x8xf32>
      %40 = vector.shape_cast %39 : vector<1x8x8xf32> to vector<8x8xf32>
      %41 = vector.broadcast %38 : vector<8x1xf32> to vector<8x8xf32>
      %42 = arith.mulf %40, %41 : vector<8x8xf32>
      %43 = arith.truncf %42 : vector<8x8xf32> to vector<8x8xbf16>
      %c0_27 = arith.constant 0 : index
      %c24 = arith.constant 24 : index
      %44 = vector.load %arg10[%c0_27, %c24] : memref<8x32xbf16, #tpu.memory_space<vmem>>, vector<8x8xbf16>
      tpu.vector_store %arg10[%c0_27, %c24], %43 {strides = array<i32>} : memref<8x32xbf16, #tpu.memory_space<vmem>>, vector<8x8xbf16>,
      %c0_28 = arith.constant 0 : index
      %c0_29 = arith.constant 0 : index
      %45 = vector.load %arg10[%c0_28, %c0_29] : memref<8x32xbf16, #tpu.memory_space<vmem>>, vector<8x32xbf16>
      %c0_30 = arith.constant 0 : index
      %c0_31 = arith.constant 0 : index
      %46 = vector.load %arg8[%c0_30, %c0_31] : memref<32x32xbf16, #tpu.memory_space<vmem>>, vector<32x32xbf16>
      %cst = arith.constant dense<0.000000e+00> : vector<8x32xf32>
      %47 = tpu.matmul %45, %46, %cst {dimension_numbers = #tpu.dot_dimension_numbers<[1], [0], [0], [1], [0, 0, 1, 1], [], []>} : vector<8x32xbf16>, vector<32x32xbf16>, vector<8x32xf32> -> vector<8x32xf32>
      %c0_32 = arith.constant 0 : index
      %c0_33 = arith.constant 0 : index
      %c0_34 = arith.constant 0 : index
      %48 = vector.load %arg9[%c0_32, %c0_33, %c0_34] : memref<1x8x32xf32, #tpu.memory_space<vmem>>, vector<1x8x32xf32>
      %49 = vector.shape_cast %48 : vector<1x8x32xf32> to vector<8x32xf32>
      %50 = vector.shape_cast %47 : vector<8x32xf32> to vector<1x8x32xf32>
      tpu.vector_store %arg9[%c0_32, %c0_33, %c0_34], %50 {strides = array<i32>} : memref<1x8x32xf32, #tpu.memory_space<vmem>>, vector<1x8x32xf32>,
    } else {
    }
    return
  }
  func.func @transform_0(%arg0: i32, %arg1: i32, %arg2: i32) -> (i32, i32, i32) {
    %c0_i32 = arith.constant 0 : i32
    %c0_i32_0 = arith.constant 0 : i32
    return %arg0, %arg1, %c0_i32 : i32, i32, i32
  }
  func.func @transform_1(%arg0: i32, %arg1: i32, %arg2: i32) -> (i32, i32, i32) {
    %0 = arith.minsi %arg2, %arg1 : i32
    %c0_i32 = arith.constant 0 : i32
    %c0_i32_0 = arith.constant 0 : i32
    return %arg0, %0, %c0_i32 : i32, i32, i32
  }
  func.func @transform_2(%arg0: i32, %arg1: i32, %arg2: i32) -> (i32, i32) {
    %c0_i32 = arith.constant 0 : i32
    %c0_i32_0 = arith.constant 0 : i32
    %c0_i32_1 = arith.constant 0 : i32
    return %c0_i32, %c0_i32_0 : i32, i32
  }
  func.func @transform_3(%arg0: i32, %arg1: i32, %arg2: i32) -> (i32, i32) {
    %c0_i32 = arith.constant 0 : i32
    %c0_i32_0 = arith.constant 0 : i32
    %c0_i32_1 = arith.constant 0 : i32
    return %c0_i32, %c0_i32_0 : i32, i32
  }
  func.func @transform_4(%arg0: i32, %arg1: i32, %arg2: i32) -> (i32, i32) {
    %c0_i32 = arith.constant 0 : i32
    %c0_i32_0 = arith.constant 0 : i32
    %c0_i32_1 = arith.constant 0 : i32
    return %c0_i32, %c0_i32_0 : i32, i32
  }
  func.func @transform_5(%arg0: i32, %arg1: i32, %arg2: i32) -> (i32, i32) {
    %c0_i32 = arith.constant 0 : i32
    %c0_i32_0 = arith.constant 0 : i32
    %c0_i32_1 = arith.constant 0 : i32
    return %c0_i32, %c0_i32_0 : i32, i32
  }
  func.func @transform_6(%arg0: i32, %arg1: i32, %arg2: i32) -> (i32, i32, i32) {
    %c0_i32 = arith.constant 0 : i32
    %c0_i32_0 = arith.constant 0 : i32
    return %arg0, %arg1, %c0_i32 : i32, i32, i32
  }
}

</mosaic_0001>

<llo_original>
// kernel: tpu_custom_call.1
$region0: #{tpu_custom_call.1}
  #allocation0 [shape = 'u32[]', space=smem, size = 0x4, offset = 0x4, fixed_abs, tag = 'smem constant byte address 0x4 - core index']
  #allocation1 [shape = 'u32[144,128]{1,0:T(1,128)}', space=vmem, size = 0x12000, scoped, tag = 'internal scratch']
  #allocation2 [shape = 'bf16[8,32]{1,0:T(8,128)(2,1)}', space=vmem, size = 0x800, scoped, tag = 'scratch operand']
  #allocation3 [shape = 'f32[4,8,1]{2,1,0:T(8,128)}', space=vmem, size = 0x4000, scoped, tag = 'scratch operand']
  #allocation4 [shape = 'f32[4,8,1]{2,1,0:T(8,128)}', space=vmem, size = 0x4000, scoped, tag = 'scratch operand']
  #allocation5 [shape = 'f32[4,8,8]{2,1,0:T(8,128)}', space=vmem, size = 0x4000, scoped, tag = 'scratch operand']
  %s0 = inlined_call_operand.hbm [shape: bf16[2,8,32], index: 0, kind: input, shape index: {}]
  %s1 = inlined_call_operand.hbm [shape: bf16[2,8,32], index: 1, kind: input, shape index: {}]
  %s2 = inlined_call_operand.hbm [shape: bf16[32,32], index: 2, kind: input, shape index: {}]
  %s3 = inlined_call_operand.hbm [shape: bf16[32,32], index: 3, kind: input, shape index: {}]
  %s4 = inlined_call_operand.hbm [shape: bf16[32,32], index: 4, kind: input, shape index: {}]
  %s5 = inlined_call_operand.vmem [shape: bf16[32,32], index: 5, kind: input, shape index: {}]
  %s6 = inlined_call_operand.hbm [shape: f32[2,8,32], index: 6, kind: output, shape index: {}]
  %s7 = sld [smem:[#allocation0]]
  $region89: #{tpu_custom_call.1} parent=0
    _
  %s9 = ssub.s32 1, %s7
  %s10 = scalar_select 0, %s9, %s7
  $region1: #{tpu_custom_call.1} parent=0
    #allocation6 [shape = 'u8[4096]{0}', space=vmem, size = 0x1000, scoped, tag = 'input window, operand 0']
    #allocation7 [shape = 's32[2]{0}', space=sflag, size = 0x8, scoped, tag = 'scoped memory for tpu_custom_call.1']
    #allocation8 [shape = 's32[2]{0}', space=sflag, size = 0x8, scoped, tag = 'scoped memory for tpu_custom_call.1']
    #allocation9 [shape = 'u8[4096]{0}', space=vmem, size = 0x1000, scoped, tag = 'input window, operand 1']
    #allocation10 [shape = 's32[2]{0}', space=sflag, size = 0x8, scoped, tag = 'scoped memory for tpu_custom_call.1']
    #allocation11 [shape = 'u8[8192]{0}', space=vmem, size = 0x2000, scoped, tag = 'input window, operand 2, single buffered']
    #allocation12 [shape = 'u8[8192]{0}', space=vmem, size = 0x2000, scoped, tag = 'input window, operand 3, single buffered']
    #allocation13 [shape = 's32[1]{0}', space=sflag, size = 0x4, scoped, tag = 'scoped memory for tpu_custom_call.1']
    #allocation14 [shape = 'u8[8192]{0}', space=vmem, size = 0x2000, scoped, tag = 'input window, operand 4, single buffered']
    #allocation15 [shape = 'u8[8192]{0}', space=vmem, size = 0x2000, scoped, tag = 'output window, operand 0']
    %11 = vsyncpa [#allocation7], 0
    %s12 = scalar_lea.sflag [#allocation7], 1
    %13 = vsyncpa %s12, 0
    %14 = vsyncpa [#allocation10], 0
    %s15 = scalar_lea.sflag [#allocation10], 1
    %16 = vsyncpa %s15, 0
    %17 = vsyncpa [#allocation13], 0
    %18 = vsyncpa [#allocation8], 0
    %s19 = scalar_lea.sflag [#allocation8], 1
    %20 = vsyncpa %s19, 0
    loop: start=0, step=1, limit=4
    $region2: #{tpu_custom_call.1} parent=1 // loop_pre_header
      _
    $region3: #{tpu_custom_call.1} parent=1 // loop_header
      %s22 = sphi 0, %s26
      %p23 = scmp.ge.s32.totalorder %s22, 4
      %s29 = sphi 0, %s48
      %s30 = sphi 0, %s44
      %s31 = sphi 0, %s40
      %s32 = sphi 0, %s29
      %s33 = sphi 0, %s30
      %s34 = sphi 0, %s31
      %s35 = sphi 0, %s32
      %s36 = sphi 0, %s33
      %s37 = sphi 0, %s34
      %s53 = sphi 0, %s55
      %s56 = sphi 0, %s53
      %s57 = sphi 0, %s56
      %s73 = sphi 0, %s57
      %s85 = sphi 0, %s87
      %s88 = sphi 0, %s85
      %s89 = sphi 0, %s88
      %s105 = sphi 0, %s89
      %s109 = sphi 0, %s109
      %s111 = sphi 0, %s109
      %s112 = sphi 0, %s111
      %s126 = sphi 0, %s112
      %s130 = sphi 0, %s130
      %s132 = sphi 0, %s130
      %s133 = sphi 0, %s132
      %s147 = sphi 0, %s133
      %s151 = sphi 0, %s151
      %s153 = sphi 0, %s151
      %s154 = sphi 0, %s153
      %s168 = sphi 0, %s154
      %s172 = sphi 0, %s172
      %s174 = sphi 0, %s172
      %s175 = sphi 0, %s174
      %s189 = sphi 0, %s175
      %s197 = sphi 0, %s199
      %s200 = sphi 0, %s197
      %s201 = sphi 0, %s200
      %s217 = sphi 0, %s201
    $region4: #{tpu_custom_call.1} parent=1 // loop_header_branch
      %25 = sbr.rel (%p23) target = $region8
    $region5: #{tpu_custom_call.1} parent=1 // loop_body
      %s27 = ssub.s32 %s22, 1
      %s28 = ssub.s32 %s22, 2
      %s38 = sadd.s32 1, %s31
      %p39 = scmp.ge.s32.totalorder %s38, 1
      %s40 = scalar_select %p39, 0, %s38
      %s41 = sadd.s32 1, %s30
      %s42 = scalar_select %p39, %s41, %s30
      %p43 = scmp.ge.s32.totalorder %s42, 1
      %s44 = scalar_select %p43, 0, %s42
      %s45 = sadd.s32 1, %s29
      %s46 = scalar_select %p43, %s45, %s29
      %p47 = scmp.ge.s32.totalorder %s46, 2
      %s48 = scalar_select %p47, 0, %s46
      %s49 = ssub.s32 %s29, %s48
      %s50 = ssub.s32 %s30, %s44
      %s51 = sor.u32 %s49, %s50
      %p52 = scmp.eq.s32.totalorder %s51, 0
      %s54 = sadd.s32 %s53, 1
      %s55 = scalar_select %p52, %s53, %s54
      %p58 = pneg %p52
      %p59 = scmp.eq.s32.totalorder %s22, 1
      %p60 = por %p58, %p59
      %p61 = scmp.ne.s32.totalorder %s53, %s56
      %p62 = scmp.eq.s32.totalorder %s22, 0
      %p63 = por %p61, %p62
      %p64 = scmp.ne.s32.totalorder %s53, %s56
      %p65 = scmp.eq.s32.totalorder %s27, 1
      %p66 = por %p64, %p65
      %p67 = scmp.ne.s32.totalorder %s56, %s57
      %p68 = scmp.eq.s32.totalorder %s27, 0
      %p69 = por %p67, %p68
      %p70 = scmp.ne.s32.totalorder %s56, %s57
      %p71 = scmp.eq.s32.totalorder %s28, 1
      %p72 = por %p70, %p71
      %p74 = scmp.ne.s32.totalorder %s57, %s73
      %p75 = scmp.eq.s32.totalorder %s28, 0
      %p76 = por %p74, %p75
      %p77 = scmp.lt.s32.totalorder %s31, %s30
      %s78 = scalar_select %p77, %s31, %s30
      %p79 = scmp.lt.s32.totalorder %s40, %s44
      %s80 = scalar_select %p79, %s40, %s44
      %s81 = ssub.s32 %s29, %s48
      %s82 = ssub.s32 %s78, %s80
      %s83 = sor.u32 %s81, %s82
      %p84 = scmp.eq.s32.totalorder %s83, 0
      %s86 = sadd.s32 %s85, 1
      %s87 = scalar_select %p84, %s85, %s86
      %p90 = pneg %p84
      %p91 = scmp.eq.s32.totalorder %s22, 1
      %p92 = por %p90, %p91
      %p93 = scmp.ne.s32.totalorder %s85, %s88
      %p94 = scmp.eq.s32.totalorder %s22, 0
      %p95 = por %p93, %p94
      %p96 = scmp.ne.s32.totalorder %s85, %s88
      %p97 = scmp.eq.s32.totalorder %s27, 1
      %p98 = por %p96, %p97
      %p99 = scmp.ne.s32.totalorder %s88, %s89
      %p100 = scmp.eq.s32.totalorder %s27, 0
      %p101 = por %p99, %p100
      %p102 = scmp.ne.s32.totalorder %s88, %s89
      %p103 = scmp.eq.s32.totalorder %s28, 1
      %p104 = por %p102, %p103
      %p106 = scmp.ne.s32.totalorder %s89, %s105
      %p107 = scmp.eq.s32.totalorder %s28, 0
      %p108 = por %p106, %p107
      %s110 = sadd.s32 %s109, 1
      %p113 = scmp.eq.s32.totalorder %s22, 1
      %p114 = scmp.ne.s32.totalorder %s109, %s111
      %p115 = scmp.eq.s32.totalorder %s22, 0
      %p116 = por %p114, %p115
      %p117 = scmp.ne.s32.totalorder %s109, %s111
      %p118 = scmp.eq.s32.totalorder %s27, 1
      %p119 = por %p117, %p118
      %p120 = scmp.ne.s32.totalorder %s111, %s112
      %p121 = scmp.eq.s32.totalorder %s27, 0
      %p122 = por %p120, %p121
      %p123 = scmp.ne.s32.totalorder %s111, %s112
      %p124 = scmp.eq.s32.totalorder %s28, 1
      %p125 = por %p123, %p124
      %p127 = scmp.ne.s32.totalorder %s112, %s126
      %p128 = scmp.eq.s32.totalorder %s28, 0
      %p129 = por %p127, %p128
      %s131 = sadd.s32 %s130, 1
      %p134 = scmp.eq.s32.totalorder %s22, 1
      %p135 = scmp.ne.s32.totalorder %s130, %s132
      %p136 = scmp.eq.s32.totalorder %s22, 0
      %p137 = por %p135, %p136
      %p138 = scmp.ne.s32.totalorder %s130, %s132
      %p139 = scmp.eq.s32.totalorder %s27, 1
      %p140 = por %p138, %p139
      %p141 = scmp.ne.s32.totalorder %s132, %s133
      %p142 = scmp.eq.s32.totalorder %s27, 0
      %p143 = por %p141, %p142
      %p144 = scmp.ne.s32.totalorder %s132, %s133
      %p145 = scmp.eq.s32.totalorder %s28, 1
      %p146 = por %p144, %p145
      %p148 = scmp.ne.s32.totalorder %s133, %s147
      %p149 = scmp.eq.s32.totalorder %s28, 0
      %p150 = por %p148, %p149
      %s152 = sadd.s32 %s151, 1
      %p155 = scmp.eq.s32.totalorder %s22, 1
      %p156 = scmp.ne.s32.totalorder %s151, %s153
      %p157 = scmp.eq.s32.totalorder %s22, 0
      %p158 = por %p156, %p157
      %p159 = scmp.ne.s32.totalorder %s151, %s153
      %p160 = scmp.eq.s32.totalorder %s27, 1
      %p161 = por %p159, %p160
      %p162 = scmp.ne.s32.totalorder %s153, %s154
      %p163 = scmp.eq.s32.totalorder %s27, 0
      %p164 = por %p162, %p163
      %p165 = scmp.ne.s32.totalorder %s153, %s154
      %p166 = scmp.eq.s32.totalorder %s28, 1
      %p167 = por %p165, %p166
      %p169 = scmp.ne.s32.totalorder %s154, %s168
      %p170 = scmp.eq.s32.totalorder %s28, 0
      %p171 = por %p169, %p170
      %s173 = sadd.s32 %s172, 1
      %p176 = scmp.eq.s32.totalorder %s22, 1
      %p177 = scmp.ne.s32.totalorder %s172, %s174
      %p178 = scmp.eq.s32.totalorder %s22, 0
      %p179 = por %p177, %p178
      %p180 = scmp.ne.s32.totalorder %s172, %s174
      %p181 = scmp.eq.s32.totalorder %s27, 1
      %p182 = por %p180, %p181
      %p183 = scmp.ne.s32.totalorder %s174, %s175
      %p184 = scmp.eq.s32.totalorder %s27, 0
      %p185 = por %p183, %p184
      %p186 = scmp.ne.s32.totalorder %s174, %s175
      %p187 = scmp.eq.s32.totalorder %s28, 1
      %p188 = por %p186, %p187
      %p190 = scmp.ne.s32.totalorder %s175, %s189
      %p191 = scmp.eq.s32.totalorder %s28, 0
      %p192 = por %p190, %p191
      %s193 = ssub.s32 %s29, %s48
      %s194 = ssub.s32 %s30, %s44
      %s195 = sor.u32 %s193, %s194
      %p196 = scmp.eq.s32.totalorder %s195, 0
      %s198 = sadd.s32 %s197, 1
      %s199 = scalar_select %p196, %s197, %s198
      %p202 = pneg %p196
      %p203 = scmp.eq.s32.totalorder %s22, 1
      %p204 = por %p202, %p203
      %p205 = scmp.ne.s32.totalorder %s197, %s200
      %p206 = scmp.eq.s32.totalorder %s22, 0
      %p207 = por %p205, %p206
      %p208 = scmp.ne.s32.totalorder %s197, %s200
      %p209 = scmp.eq.s32.totalorder %s27, 1
      %p210 = por %p208, %p209
      %p211 = scmp.ne.s32.totalorder %s200, %s201
      %p212 = scmp.eq.s32.totalorder %s27, 0
      %p213 = por %p211, %p212
      %p214 = scmp.ne.s32.totalorder %s200, %s201
      %p215 = scmp.eq.s32.totalorder %s28, 1
      %p216 = por %p214, %p215
      %p218 = scmp.ne.s32.totalorder %s201, %s217
      %p219 = scmp.eq.s32.totalorder %s28, 0
      %p220 = por %p218, %p219
      %p221 = scmp.le.s32.totalorder 1, %s22
      %p222 = scmp.lt.s32.totalorder %s22, 3
      %p223 = pnand %p221, %p222
      %p224 = pneg %p223
      // Predicated region
      $region9: #{tpu_custom_call.1} parent=5 // pred_check
        _
      $region10: #{tpu_custom_call.1} parent=5 // pred_check_branch
        %226 = sbr.rel (%p223) target = $region12
      $region11: #{tpu_custom_call.1} parent=5 // pred_region
        %s227 = ssub.s32 %s22, 1
        // Predicated region
        $region13: #{tpu_custom_call.1} parent=11 // pred_check
          %p228 = pneg %p122
        $region14: #{tpu_custom_call.1} parent=11 // pred_check_branch
          %230 = sbr.rel (%p228) target = $region16
        $region15: #{tpu_custom_call.1} parent=11 // pred_region
          %s232 = ssub.s32 256, 256
          %233 = vsyncadd [#allocation10], %s232
          %s234 = sshll.u32 [#allocation11], 4
          %s235 = int_to_ptr.vmem [resolvable:$true] %s234
          %240 = dma.hbm_to_vmem [thread:$0]  %s2, 256, %s235, [#allocation10], 64, 64, 4
        $region16: #{tpu_custom_call.1} parent=11 // pred_fallthru
          _
        // Predicated region
        $region17: #{tpu_custom_call.1} parent=11 // pred_check
          %p241 = pneg %p143
        $region18: #{tpu_custom_call.1} parent=11 // pred_check_branch
          %243 = sbr.rel (%p241) target = $region20
        $region19: #{tpu_custom_call.1} parent=11 // pred_region
          %s245 = ssub.s32 256, 256
          %246 = vsyncadd [#allocation13], %s245
          %s247 = sshll.u32 [#allocation12], 4
          %s248 = int_to_ptr.vmem [resolvable:$true] %s247
          %253 = dma.hbm_to_vmem [thread:$0]  %s3, 256, %s248, [#allocation13], 64, 64, 4
        $region20: #{tpu_custom_call.1} parent=11 // pred_fallthru
          _
        // Predicated region
        $region21: #{tpu_custom_call.1} parent=11 // pred_check
          %p254 = pneg %p164
        $region22: #{tpu_custom_call.1} parent=11 // pred_check_branch
          %256 = sbr.rel (%p254) target = $region24
        $region23: #{tpu_custom_call.1} parent=11 // pred_region
          %s258 = ssub.s32 256, 256
          %259 = vsyncadd [#allocation13], %s258
          %s260 = sshll.u32 [#allocation14], 4
          %s261 = int_to_ptr.vmem [resolvable:$true] %s260
          %266 = dma.hbm_to_vmem [thread:$0]  %s4, 256, %s261, [#allocation13], 64, 64, 4
        $region24: #{tpu_custom_call.1} parent=11 // pred_fallthru
          _
        // Predicated region
        $region25: #{tpu_custom_call.1} parent=11 // pred_check
          %p267 = pneg %p185
        $region26: #{tpu_custom_call.1} parent=11 // pred_check_branch
          %269 = sbr.rel (%p267) target = $region28
        $region27: #{tpu_custom_call.1} parent=11 // pred_region
          _
        $region28: #{tpu_custom_call.1} parent=11 // pred_fallthru
          _
      $region12: #{tpu_custom_call.1} parent=5 // pred_fallthru
        _
      %p270 = scmp.lt.s32.totalorder %s22, 2
      // Predicated region
      $region29: #{tpu_custom_call.1} parent=5 // pred_check
        %p271 = pneg %p270
      $region30: #{tpu_custom_call.1} parent=5 // pred_check_branch
        %273 = sbr.rel (%p271) target = $region32
      $region31: #{tpu_custom_call.1} parent=5 // pred_region
        // Predicated region
        $region33: #{tpu_custom_call.1} parent=31 // pred_check
          %p274 = pneg %p63
        $region34: #{tpu_custom_call.1} parent=31 // pred_check_branch
          %276 = sbr.rel (%p274) target = $region36
        $region35: #{tpu_custom_call.1} parent=31 // pred_region
          %s277 = sand.u32 %s53, 1
          %s278 = scalar_lea.sflag [#allocation7], %s277
          %s279 = sand.u32 %s53, 1
          %s280 = smul.addr %s279, 4
          %s281 = scalar_lea.vmem [#allocation6], %s280
          %s283 = ssub.s32 64, 64
          %284 = vsyncadd %s278, %s283
          %s285 = sadd.s32 %s30, %s29
          %s286 = smul.addr %s285, 64
          %s287 = scalar_lea.hbm %s0, %s286
          %s289 = sshll.u32 %s281, 4
          %s290 = int_to_ptr.vmem [resolvable:$true] %s289
          %292 = dma.hbm_to_vmem [thread:$0]  %s287, 64, %s290, %s278
        $region36: #{tpu_custom_call.1} parent=31 // pred_fallthru
          _
        // Predicated region
        $region37: #{tpu_custom_call.1} parent=31 // pred_check
          %p293 = pneg %p95
        $region38: #{tpu_custom_call.1} parent=31 // pred_check_branch
          %295 = sbr.rel (%p293) target = $region40
        $region39: #{tpu_custom_call.1} parent=31 // pred_region
          %s296 = sand.u32 %s22, 1
          %s297 = scalar_lea.sflag [#allocation10], %s296
          %s298 = sand.u32 %s85, 1
          %s299 = smul.addr %s298, 4
          %s300 = scalar_lea.vmem [#allocation9], %s299
          %p301 = scmp.lt.s32.totalorder %s31, %s30
          %s302 = scalar_select %p301, %s31, %s30
          %s304 = ssub.s32 64, 64
          %305 = vsyncadd %s297, %s304
          %s306 = sadd.s32 %s302, %s29
          %s307 = smul.addr %s306, 64
          %s308 = scalar_lea.hbm %s1, %s307
          %s310 = sshll.u32 %s300, 4
          %s311 = int_to_ptr.vmem [resolvable:$true] %s310
          %313 = dma.hbm_to_vmem [thread:$0]  %s308, 64, %s311, %s297
        $region40: #{tpu_custom_call.1} parent=31 // pred_fallthru
          _
      $region32: #{tpu_custom_call.1} parent=5 // pred_fallthru
        _
      %p314 = scmp.le.s32.totalorder 1, %s22
      %p315 = scmp.lt.s32.totalorder %s22, 3
      %p316 = pnand %p314, %p315
      %p317 = pneg %p316
      // Predicated region
      $region41: #{tpu_custom_call.1} parent=5 // pred_check
        _
      $region42: #{tpu_custom_call.1} parent=5 // pred_check_branch
        %319 = sbr.rel (%p316) target = $region44
      $region43: #{tpu_custom_call.1} parent=5 // pred_region
        %s320 = ssub.s32 %s22, 1
        %s321 = sand.u32 %s56, 1
        %s322 = scalar_lea.sflag [#allocation7], %s321
        %s323 = sand.u32 %s56, 1
        %s324 = smul.addr %s323, 4
        %s325 = scalar_lea.vmem [#allocation6], %s324
        // Predicated region
        $region45: #{tpu_custom_call.1} parent=43 // pred_check
          %p326 = pneg %p69
        $region46: #{tpu_custom_call.1} parent=43 // pred_check_branch
          %328 = sbr.rel (%p326) target = $region48
        $region47: #{tpu_custom_call.1} parent=43 // pred_region
          %329 = dma.done %s322, 64
        $region48: #{tpu_custom_call.1} parent=43 // pred_fallthru
          _
        %s330 = sand.u32 %s27, 1
        %s331 = scalar_lea.sflag [#allocation10], %s330
        %s332 = sand.u32 %s88, 1
        %s333 = smul.addr %s332, 4
        %s334 = scalar_lea.vmem [#allocation9], %s333
        // Predicated region
        $region49: #{tpu_custom_call.1} parent=43 // pred_check
          %p335 = pneg %p101
        $region50: #{tpu_custom_call.1} parent=43 // pred_check_branch
          %337 = sbr.rel (%p335) target = $region52
        $region51: #{tpu_custom_call.1} parent=43 // pred_region
          %338 = dma.done %s331, 64
        $region52: #{tpu_custom_call.1} parent=43 // pred_fallthru
          _
        // Predicated region
        $region53: #{tpu_custom_call.1} parent=43 // pred_check
          %p339 = pneg %p122
        $region54: #{tpu_custom_call.1} parent=43 // pred_check_branch
          %341 = sbr.rel (%p339) target = $region56
        $region55: #{tpu_custom_call.1} parent=43 // pred_region
          %342 = dma.done [#allocation10], 256
        $region56: #{tpu_custom_call.1} parent=43 // pred_fallthru
          _
        // Predicated region
        $region57: #{tpu_custom_call.1} parent=43 // pred_check
          %p343 = pneg %p143
        $region58: #{tpu_custom_call.1} parent=43 // pred_check_branch
          %345 = sbr.rel (%p343) target = $region60
        $region59: #{tpu_custom_call.1} parent=43 // pred_region
          %346 = dma.done [#allocation13], 256
        $region60: #{tpu_custom_call.1} parent=43 // pred_fallthru
          _
        // Predicated region
        $region61: #{tpu_custom_call.1} parent=43 // pred_check
          %p347 = pneg %p164
        $region62: #{tpu_custom_call.1} parent=43 // pred_check_branch
          %349 = sbr.rel (%p347) target = $region64
        $region63: #{tpu_custom_call.1} parent=43 // pred_region
          %350 = dma.done [#allocation13], 256
        $region64: #{tpu_custom_call.1} parent=43 // pred_fallthru
          _
        %s351 = sand.u32 %s56, 1
        %s352 = scalar_lea.sflag [#allocation7], %s351
        %s353 = sand.u32 %s56, 1
        %s354 = smul.addr %s353, 4
        %s355 = scalar_lea.vmem [#allocation6], %s354
        %p356 = pneg %p69
        %p357 = pneg %p66
        %s358 = sand.u32 %s27, 1
        %s359 = scalar_lea.sflag [#allocation10], %s358
        %s360 = sand.u32 %s88, 1
        %s361 = smul.addr %s360, 4
        %s362 = scalar_lea.vmem [#allocation9], %s361
        %p363 = pneg %p101
        %p364 = pneg %p98
        %p365 = pneg %p122
        %p366 = pneg %p119
        %p367 = pneg %p143
        %p368 = pneg %p140
        %p369 = pneg %p164
        %p370 = pneg %p161
        %p371 = pneg %p185
        %p372 = pneg %p182
        %p373 = pneg %p213
        %p374 = pneg %p210
        %s375 = sand.u32 %s200, 1
        %s376 = scalar_lea.sflag [#allocation8], %s375
        %s377 = sand.u32 %s200, 1
        %s378 = smul.addr %s377, 8
        %s379 = scalar_lea.vmem [#allocation15], %s378
        %p380 = scmp.lt.s32.totalorder %s34, %s33
        %s381 = scalar_select %p380, %s34, %s33
        %p383 = scmp.eq.s32.totalorder %s34, 0
        // Predicated region
        $region65: #{tpu_custom_call.1} parent=43 // pred_check
          %p384 = pneg %p383
        $region66: #{tpu_custom_call.1} parent=43 // pred_check_branch
          %386 = sbr.rel (%p384) target = $region68
        $region67: #{tpu_custom_call.1} parent=43 // pred_region
          %v387 = vld [vmem:[%s325] sm:$0xf]
          %v388 = vld [vmem:[#allocation11] sm:$0xf]
          %v389 = vld [vmem:[#allocation11 + $0x4] sm:$0xf]
          %v390 = vld [vmem:[#allocation11 + $0x8] sm:$0xf]
          %v391 = vld [vmem:[#allocation11 + $0xc] sm:$0xf]
          %v396 = vunpack.c.l.b16 %v388
          %v397 = vunpack.c.l.b16 %v389
          %v398 = vunpack.c.l.b16 %v390
          %v399 = vunpack.c.l.b16 %v391
          %v400 = vpack.c.b16 %v397, %v396
          %v401 = vpack.c.b16 %v399, %v398
          %vm404 = vcmask 261120
          %v406 = vsel %vm404, %v387, 0
          %408 = vmatprep.subr.bf16.mxu0 0
          %409 = vmatpush1.bf16.msra.mxu0 %v400
          %410 = vmatprep.subr.bf16.mxu0 0
          %411 = vmatpush1.bf16.msra.mxu0 %v401
          %412 = vmatprep.subr.bf16.mxu0 0
          %413 = vmatpush1.bf16.msra.mxu0 0
          %414 = vmatprep.subr.bf16.mxu0 0
          %415 = vmatpush1.bf16.msra.mxu0 0
          %416 = vmatprep.subr.bf16.mxu0 0
          %417 = vmatpush1.bf16.msra.mxu0 0
          %418 = vmatprep.subr.bf16.mxu0 0
          %419 = vmatpush1.bf16.msra.mxu0 0
          %420 = vmatprep.subr.bf16.mxu0 0
          %421 = vmatpush1.bf16.msra.mxu0 0
          %422 = vmatprep.subr.bf16.mxu0 0
          %423 = vmatpush1.bf16.msra.mxu0 0
          %424 = vmatprep.subr.bf16.mxu0 0
          %425 = vmatpush1.bf16.msra.mxu0 0
          %426 = vmatprep.subr.bf16.mxu0 0
          %427 = vmatpush1.bf16.msra.mxu0 0
          %428 = vmatprep.subr.bf16.mxu0 0
          %429 = vmatpush1.bf16.msra.mxu0 0
          %430 = vmatprep.subr.bf16.mxu0 0
          %431 = vmatpush1.bf16.msra.mxu0 0
          %432 = vmatprep.subr.bf16.mxu0 0
          %433 = vmatpush1.bf16.msra.mxu0 0
          %434 = vmatprep.subr.bf16.mxu0 0
          %435 = vmatpush1.bf16.msra.mxu0 0
          %436 = vmatprep.subr.bf16.mxu0 0
          %437 = vmatpush1.bf16.msra.mxu0 0
          %438 = vmatprep.subr.bf16.mxu0 0
          %439 = vmatpush1.bf16.msra.mxu0 0
          %440 = vmatprep.mubr.bf16.mxu0 0
          %441 = vmatmul.mubr.bf16.gmra.mrb[0].mxu0 %v406
          %v442 = vpop.f32.mrb[0].mxu0
          %v443 = vadd.f32 0.0, %v442
          %v444 = vpop.f32.mrb[0].mxu0
          %v445 = vpop.f32.mrb[0].mxu0
          %v446 = vpop.f32.mrb[0].mxu0
          %447 = vdwg.mxu0
          %v448 = vmul.f32 %v443, 0.35355338
          %v449 = vpack.c.bf16 %v448, %v448
          %vm450 = vcmask 257024
          %451 = vst.msk [vmem:[#allocation2] sm:$0xf] %vm450, %v449
          %vm452 = vcmask 7168
          %453 = vst.msk [vmem:[#allocation3] sm:$0xff] %vm452, -inf
          %454 = vst.msk [vmem:[#allocation3 + $0x8] sm:$0xff] %vm452, -inf
          %455 = vst.msk [vmem:[#allocation3 + $0x10] sm:$0xff] %vm452, -inf
          %456 = vst.msk [vmem:[#allocation3 + $0x18] sm:$0xff] %vm452, -inf
          %457 = vst.msk [vmem:[#allocation4] sm:$0xff] %vm452, 0.0
          %458 = vst.msk [vmem:[#allocation4 + $0x8] sm:$0xff] %vm452, 0.0
          %459 = vst.msk [vmem:[#allocation4 + $0x10] sm:$0xff] %vm452, 0.0
          %460 = vst.msk [vmem:[#allocation4 + $0x18] sm:$0xff] %vm452, 0.0
          %vm461 = vcmask 64512
          %462 = vst.msk [vmem:[#allocation5] sm:$0xff] %vm461, 0.0
          %463 = vst.msk [vmem:[#allocation5 + $0x8] sm:$0xff] %vm461, 0.0
          %464 = vst.msk [vmem:[#allocation5 + $0x10] sm:$0xff] %vm461, 0.0
          %465 = vst.msk [vmem:[#allocation5 + $0x18] sm:$0xff] %vm461, 0.0
        $region68: #{tpu_custom_call.1} parent=43 // pred_fallthru
          _
        %p466 = scmp.le.s32.totalorder %s34, %s33
        // Predicated region
        $region69: #{tpu_custom_call.1} parent=43 // pred_check
          %p467 = pneg %p466
        $region70: #{tpu_custom_call.1} parent=43 // pred_check_branch
          %469 = sbr.rel (%p467) target = $region72
        $region71: #{tpu_custom_call.1} parent=43 // pred_region
          %v470 = vld [vmem:[%s334] sm:$0xf]
          %v471 = vld [vmem:[#allocation12] sm:$0xf]
          %v472 = vld [vmem:[#allocation12 + $0x4] sm:$0xf]
          %v473 = vld [vmem:[#allocation12 + $0x8] sm:$0xf]
          %v474 = vld [vmem:[#allocation12 + $0xc] sm:$0xf]
          %v479 = vunpack.c.l.b16 %v471
          %v480 = vunpack.c.l.b16 %v472
          %v481 = vunpack.c.l.b16 %v473
          %v482 = vunpack.c.l.b16 %v474
          %v483 = vpack.c.b16 %v480, %v479
          %v484 = vpack.c.b16 %v482, %v481
          %vm487 = vcmask 261120
          %v489 = vsel %vm487, %v470, 0
          %491 = vmatprep.subr.bf16.mxu0 0
          %492 = vmatpush1.bf16.msra.mxu0 %v483
          %493 = vmatprep.subr.bf16.mxu0 0
          %494 = vmatpush1.bf16.msra.mxu0 %v484
          %495 = vmatprep.subr.bf16.mxu0 0
          %496 = vmatpush1.bf16.msra.mxu0 0
          %497 = vmatprep.subr.bf16.mxu0 0
          %498 = vmatpush1.bf16.msra.mxu0 0
          %499 = vmatprep.subr.bf16.mxu0 0
          %500 = vmatpush1.bf16.msra.mxu0 0
          %501 = vmatprep.subr.bf16.mxu0 0
          %502 = vmatpush1.bf16.msra.mxu0 0
          %503 = vmatprep.subr.bf16.mxu0 0
          %504 = vmatpush1.bf16.msra.mxu0 0
          %505 = vmatprep.subr.bf16.mxu0 0
          %506 = vmatpush1.bf16.msra.mxu0 0
          %507 = vmatprep.subr.bf16.mxu0 0
          %508 = vmatpush1.bf16.msra.mxu0 0
          %509 = vmatprep.subr.bf16.mxu0 0
          %510 = vmatpush1.bf16.msra.mxu0 0
          %511 = vmatprep.subr.bf16.mxu0 0
          %512 = vmatpush1.bf16.msra.mxu0 0
          %513 = vmatprep.subr.bf16.mxu0 0
          %514 = vmatpush1.bf16.msra.mxu0 0
          %515 = vmatprep.subr.bf16.mxu0 0
          %516 = vmatpush1.bf16.msra.mxu0 0
          %517 = vmatprep.subr.bf16.mxu0 0
          %518 = vmatpush1.bf16.msra.mxu0 0
          %519 = vmatprep.subr.bf16.mxu0 0
          %520 = vmatpush1.bf16.msra.mxu0 0
          %521 = vmatprep.subr.bf16.mxu0 0
          %522 = vmatpush1.bf16.msra.mxu0 0
          %523 = vmatprep.mubr.bf16.mxu0 0
          %524 = vmatmul.mubr.bf16.gmra.mrb[0].mxu0 %v489
          %v525 = vpop.f32.mrb[0].mxu0
          %v526 = vadd.f32 0.0, %v525
          %v527 = vpop.f32.mrb[0].mxu0
          %v528 = vpop.f32.mrb[0].mxu0
          %v529 = vpop.f32.mrb[0].mxu0
          %530 = vdwg.mxu0
          %v531 = vpack.c.bf16 %v526, %v526
          %v532 = vld [vmem:[#allocation14] sm:$0xf]
          %v533 = vld [vmem:[#allocation14 + $0x4] sm:$0xf]
          %v534 = vld [vmem:[#allocation14 + $0x8] sm:$0xf]
          %v535 = vld [vmem:[#allocation14 + $0xc] sm:$0xf]
          %v540 = vunpack.c.l.b16 %v532
          %v541 = vunpack.c.l.b16 %v533
          %v542 = vunpack.c.l.b16 %v534
          %v543 = vunpack.c.l.b16 %v535
          %v544 = vpack.c.b16 %v541, %v540
          %v545 = vpack.c.b16 %v543, %v542
          %548 = vmatprep.subr.bf16.mxu0 0
          %549 = vmatpush1.bf16.msra.mxu0 %v544
          %550 = vmatprep.subr.bf16.mxu0 0
          %551 = vmatpush1.bf16.msra.mxu0 %v545
          %552 = vmatprep.subr.bf16.mxu0 0
          %553 = vmatpush1.bf16.msra.mxu0 0
          %554 = vmatprep.subr.bf16.mxu0 0
          %555 = vmatpush1.bf16.msra.mxu0 0
          %556 = vmatprep.subr.bf16.mxu0 0
          %557 = vmatpush1.bf16.msra.mxu0 0
          %558 = vmatprep.subr.bf16.mxu0 0
          %559 = vmatpush1.bf16.msra.mxu0 0
          %560 = vmatprep.subr.bf16.mxu0 0
          %561 = vmatpush1.bf16.msra.mxu0 0
          %562 = vmatprep.subr.bf16.mxu0 0
          %563 = vmatpush1.bf16.msra.mxu0 0
          %564 = vmatprep.subr.bf16.mxu0 0
          %565 = vmatpush1.bf16.msra.mxu0 0
          %566 = vmatprep.subr.bf16.mxu0 0
          %567 = vmatpush1.bf16.msra.mxu0 0
          %568 = vmatprep.subr.bf16.mxu0 0
          %569 = vmatpush1.bf16.msra.mxu0 0
          %570 = vmatprep.subr.bf16.mxu0 0
          %571 = vmatpush1.bf16.msra.mxu0 0
          %572 = vmatprep.subr.bf16.mxu0 0
          %573 = vmatpush1.bf16.msra.mxu0 0
          %574 = vmatprep.subr.bf16.mxu0 0
          %575 = vmatpush1.bf16.msra.mxu0 0
          %576 = vmatprep.subr.bf16.mxu0 0
          %577 = vmatpush1.bf16.msra.mxu0 0
          %578 = vmatprep.subr.bf16.mxu0 0
          %579 = vmatpush1.bf16.msra.mxu0 0
          %580 = vmatprep.mubr.bf16.mxu0 0
          %581 = vmatmul.mubr.bf16.gmra.mrb[0].mxu0 %v489
          %v582 = vpop.f32.mrb[0].mxu0
          %v583 = vadd.f32 0.0, %v582
          %v584 = vpop.f32.mrb[0].mxu0
          %v585 = vpop.f32.mrb[0].mxu0
          %v586 = vpop.f32.mrb[0].mxu0
          %587 = vdwg.mxu0
          %v588 = vpack.c.bf16 %v583, %v583
          %s589 = smul.u32 %s33, 8
          %v590 = vlaneseq
          %v591 = vshrl.u32 %v590, 7
          %v592 = vstv %s589
          %v593 = vadd.s32 %v592, %v591
          %s594 = smul.u32 %s34, 8
          %v595 = vlaneseq
          %v596 = vand.u32 %v595, 127
          %v597 = vstv %s594
          %v598 = vadd.s32 %v597, %v596
          %vm599 = vcmp.le.s32.totalorder %v598, %v593
          %v600 = vld [vmem:[#allocation2] sm:$0xf]
          %vm601 = vcmask 64512
          %v603 = vsel %vm601, %v600, 0
          %v606 = vsel %vm601, %v531, 0
          %608 = vmatprep.subr.bf16.mxu0 0
          %609 = vmatpush1.bf16.xpose.msra.mxu0 %v606
          %610 = vmatprep.subr.bf16.mxu0 0
          %611 = vmatpush1.bf16.xpose.msra.mxu0 0
          %612 = vmatprep.subr.bf16.mxu0 0
          %613 = vmatpush1.bf16.xpose.msra.mxu0 0
          %614 = vmatprep.subr.bf16.mxu0 0
          %615 = vmatpush1.bf16.xpose.msra.mxu0 0
          %616 = vmatprep.subr.bf16.mxu0 0
          %617 = vmatpush1.bf16.xpose.msra.mxu0 0
          %618 = vmatprep.subr.bf16.mxu0 0
          %619 = vmatpush1.bf16.xpose.msra.mxu0 0
          %620 = vmatprep.subr.bf16.mxu0 0
          %621 = vmatpush1.bf16.xpose.msra.mxu0 0
          %622 = vmatprep.subr.bf16.mxu0 0
          %623 = vmatpush1.bf16.xpose.msra.mxu0 0
          %624 = vmatprep.subr.bf16.mxu0 0
          %625 = vmatpush1.bf16.xpose.msra.mxu0 0
          %626 = vmatprep.subr.bf16.mxu0 0
          %627 = vmatpush1.bf16.xpose.msra.mxu0 0
          %628 = vmatprep.subr.bf16.mxu0 0
          %629 = vmatpush1.bf16.xpose.msra.mxu0 0
          %630 = vmatprep.subr.bf16.mxu0 0
          %631 = vmatpush1.bf16.xpose.msra.mxu0 0
          %632 = vmatprep.subr.bf16.mxu0 0
          %633 = vmatpush1.bf16.xpose.msra.mxu0 0
          %634 = vmatprep.subr.bf16.mxu0 0
          %635 = vmatpush1.bf16.xpose.msra.mxu0 0
          %636 = vmatprep.subr.bf16.mxu0 0
          %637 = vmatpush1.bf16.xpose.msra.mxu0 0
          %638 = vmatprep.subr.bf16.mxu0 0
          %639 = vmatpush1.bf16.xpose.msra.mxu0 0
          %640 = vmatprep.mubr.bf16.mxu0 0
          %641 = vmatmul.mubr.bf16.gmra.mrb[0].mxu0 %v603
          %v642 = vpop.f32.mrb[0].mxu0
          %v643 = vadd.f32 0.0, %v642
          %v644 = vpop.f32.mrb[0].mxu0
          %v645 = vpop.f32.mrb[0].mxu0
          %v646 = vpop.f32.mrb[0].mxu0
          %647 = vdwg.mxu0
          %v648 = vsel %vm599, %v643, -inf
          %v649 = vld [vmem:[#allocation3] sm:$0xff]
          %v650 = vsel %vm601, %v648, -inf
          %651 = vmax.xlane.f32.xlu0 %v650
          %v652 = vpop.xlane.xlu0 %651
          %v653 = vmax.f32 %v649, %v652
          %v654 = vsub.f32 %v649, %v653
          %v655 = vmul.f32 %v654, 1.442695
          %v656 = vpow.pop %v655
          %658 = vset.pattern.permute.xlu0 0
          %659 = vperm.xlu0 %658, %v653
          %v660 = vpop.permute.xlu0 %659
          %v662 = vsub.f32 %v648, %v660
          %v663 = vmul.f32 %v662, 1.442695
          %v664 = vpow.pop %v663
          %v665 = vld [vmem:[#allocation4] sm:$0xff]
          %v666 = vmul.f32 %v656, %v665
          %v667 = vsel %vm601, %v664, 0.0
          %668 = vadd.xlane.f32.xlu0 %v667
          %v669 = vpop.xlane.xlu0 %668
          %v670 = vadd.f32 %v666, %v669
          %vm671 = vcmask 7168
          %672 = vst.msk [vmem:[#allocation4] sm:$0xff] %vm671, %v670
          %v673 = vld [vmem:[#allocation5] sm:$0xff]
          %675 = vset.pattern.permute.xlu0 0
          %676 = vperm.xlu0 %675, %v656
          %v677 = vpop.permute.xlu0 %676
          %v679 = vmul.f32 %v677, %v673
          %v680 = vpack.c.bf16 %v664, %v664
          %v682 = vsel %vm601, %v680, 0
          %vm684 = vcmask 1043456
          %v686 = vsel %vm684, %v588, 0
          %688 = vmatprep.subr.bf16.mxu0 0
          %689 = vmatpush1.bf16.msra.mxu0 %v686
          %690 = vmatprep.subr.bf16.mxu0 0
          %691 = vmatpush1.bf16.msra.mxu0 0
          %692 = vmatprep.subr.bf16.mxu0 0
          %693 = vmatpush1.bf16.msra.mxu0 0
          %694 = vmatprep.subr.bf16.mxu0 0
          %695 = vmatpush1.bf16.msra.mxu0 0
          %696 = vmatprep.subr.bf16.mxu0 0
          %697 = vmatpush1.bf16.msra.mxu0 0
          %698 = vmatprep.subr.bf16.mxu0 0
          %699 = vmatpush1.bf16.msra.mxu0 0
          %700 = vmatprep.subr.bf16.mxu0 0
          %701 = vmatpush1.bf16.msra.mxu0 0
          %702 = vmatprep.subr.bf16.mxu0 0
          %703 = vmatpush1.bf16.msra.mxu0 0
          %704 = vmatprep.subr.bf16.mxu0 0
          %705 = vmatpush1.bf16.msra.mxu0 0
          %706 = vmatprep.subr.bf16.mxu0 0
          %707 = vmatpush1.bf16.msra.mxu0 0
          %708 = vmatprep.subr.bf16.mxu0 0
          %709 = vmatpush1.bf16.msra.mxu0 0
          %710 = vmatprep.subr.bf16.mxu0 0
          %711 = vmatpush1.bf16.msra.mxu0 0
          %712 = vmatprep.subr.bf16.mxu0 0
          %713 = vmatpush1.bf16.msra.mxu0 0
          %714 = vmatprep.subr.bf16.mxu0 0
          %715 = vmatpush1.bf16.msra.mxu0 0
          %716 = vmatprep.subr.bf16.mxu0 0
          %717 = vmatpush1.bf16.msra.mxu0 0
          %718 = vmatprep.subr.bf16.mxu0 0
          %719 = vmatpush1.bf16.msra.mxu0 0
          %720 = vmatprep.mubr.bf16.mxu0 0
          %721 = vmatmul.mubr.bf16.gmra.mrb[0].mxu0 %v682
          %v722 = vpop.f32.mrb[0].mxu0
          %v723 = vadd.f32 0.0, %v722
          %v724 = vpop.f32.mrb[0].mxu0
          %v725 = vpop.f32.mrb[0].mxu0
          %v726 = vpop.f32.mrb[0].mxu0
          %727 = vdwg.mxu0
          %v728 = vadd.f32 %v679, %v723
          %729 = vst.msk [vmem:[#allocation5] sm:$0xff] %vm601, %v728
          %730 = vst.msk [vmem:[#allocation3] sm:$0xff] %vm671, %v653
          %v731 = vld [vmem:[#allocation2] sm:$0xf]
          %v733 = vunpack.c.l.b16 %v731
          %v734 = vpack.c.b16 %v733, %v733
          %735 = vrot.lane.b32.xlu0 %v734, 120
          %v736 = vpop.permute.xlu0 %735
          %738 = vrot.lane.b32.xlu0 %v531, 120
          %v739 = vpop.permute.xlu0 %738
          %v741 = vsel %vm601, %v736, 0
          %v744 = vsel %vm601, %v739, 0
          %746 = vmatprep.subr.bf16.mxu0 0
          %747 = vmatpush1.bf16.xpose.msra.mxu0 %v744
          %748 = vmatprep.subr.bf16.mxu0 0
          %749 = vmatpush1.bf16.xpose.msra.mxu0 0
          %750 = vmatprep.subr.bf16.mxu0 0
          %751 = vmatpush1.bf16.xpose.msra.mxu0 0
          %752 = vmatprep.subr.bf16.mxu0 0
          %753 = vmatpush1.bf16.xpose.msra.mxu0 0
          %754 = vmatprep.subr.bf16.mxu0 0
          %755 = vmatpush1.bf16.xpose.msra.mxu0 0
          %756 = vmatprep.subr.bf16.mxu0 0
          %757 = vmatpush1.bf16.xpose.msra.mxu0 0
          %758 = vmatprep.subr.bf16.mxu0 0
          %759 = vmatpush1.bf16.xpose.msra.mxu0 0
          %760 = vmatprep.subr.bf16.mxu0 0
          %761 = vmatpush1.bf16.xpose.msra.mxu0 0
          %762 = vmatprep.subr.bf16.mxu0 0
          %763 = vmatpush1.bf16.xpose.msra.mxu0 0
          %764 = vmatprep.subr.bf16.mxu0 0
          %765 = vmatpush1.bf16.xpose.msra.mxu0 0
          %766 = vmatprep.subr.bf16.mxu0 0
          %767 = vmatpush1.bf16.xpose.msra.mxu0 0
          %768 = vmatprep.subr.bf16.mxu0 0
          %769 = vmatpush1.bf16.xpose.msra.mxu0 0
          %770 = vmatprep.subr.bf16.mxu0 0
          %771 = vmatpush1.bf16.xpose.msra.mxu0 0
          %772 = vmatprep.subr.bf16.mxu0 0
          %773 = vmatpush1.bf16.xpose.msra.mxu0 0
          %774 = vmatprep.subr.bf16.mxu0 0
          %775 = vmatpush1.bf16.xpose.msra.mxu0 0
          %776 = vmatprep.subr.bf16.mxu0 0
          %777 = vmatpush1.bf16.xpose.msra.mxu0 0
          %778 = vmatprep.mubr.bf16.mxu0 0
          %779 = vmatmul.mubr.bf16.gmra.mrb[0].mxu0 %v741
          %v780 = vpop.f32.mrb[0].mxu0
          %v781 = vadd.f32 0.0, %v780
          %v782 = vpop.f32.mrb[0].mxu0
          %v783 = vpop.f32.mrb[0].mxu0
          %v784 = vpop.f32.mrb[0].mxu0
          %785 = vdwg.mxu0
          %v786 = vsel %vm599, %v781, -inf
          %s787 = scalar_lea.vmem [#allocation3], 8
          %v788 = vld [vmem:[%s787] sm:$0xff]
          %v789 = vsel %vm601, %v786, -inf
          %790 = vmax.xlane.f32.xlu0 %v789
          %v791 = vpop.xlane.xlu0 %790
          %v792 = vmax.f32 %v788, %v791
          %v793 = vsub.f32 %v788, %v792
          %v794 = vmul.f32 %v793, 1.442695
          %v795 = vpow.pop %v794
          %797 = vset.pattern.permute.xlu0 0
          %798 = vperm.xlu0 %797, %v792
          %v799 = vpop.permute.xlu0 %798
          %v801 = vsub.f32 %v786, %v799
          %v802 = vmul.f32 %v801, 1.442695
          %v803 = vpow.pop %v802
          %s804 = scalar_lea.vmem [#allocation4], 8
          %v805 = vld [vmem:[%s804] sm:$0xff]
          %v806 = vmul.f32 %v795, %v805
          %v807 = vsel %vm601, %v803, 0.0
          %808 = vadd.xlane.f32.xlu0 %v807
          %v809 = vpop.xlane.xlu0 %808
          %v810 = vadd.f32 %v806, %v809
          %811 = vst.msk [vmem:[%s804] sm:$0xff] %vm671, %v810
          %s812 = scalar_lea.vmem [#allocation5], 8
          %v813 = vld [vmem:[%s812] sm:$0xff]
          %815 = vset.pattern.permute.xlu0 0
          %816 = vperm.xlu0 %815, %v795
          %v817 = vpop.permute.xlu0 %816
          %v819 = vmul.f32 %v817, %v813
          %v820 = vpack.c.bf16 %v803, %v803
          %822 = vrot.lane.b32.xlu0 %v588, 120
          %v823 = vpop.permute.xlu0 %822
          %v825 = vsel %vm601, %v820, 0
          %v828 = vsel %vm684, %v823, 0
          %830 = vmatprep.subr.bf16.mxu0 0
          %831 = vmatpush1.bf16.msra.mxu0 %v828
          %832 = vmatprep.subr.bf16.mxu0 0
          %833 = vmatpush1.bf16.msra.mxu0 0
          %834 = vmatprep.subr.bf16.mxu0 0
          %835 = vmatpush1.bf16.msra.mxu0 0
          %836 = vmatprep.subr.bf16.mxu0 0
          %837 = vmatpush1.bf16.msra.mxu0 0
          %838 = vmatprep.subr.bf16.mxu0 0
          %839 = vmatpush1.bf16.msra.mxu0 0
          %840 = vmatprep.subr.bf16.mxu0 0
          %841 = vmatpush1.bf16.msra.mxu0 0
          %842 = vmatprep.subr.bf16.mxu0 0
          %843 = vmatpush1.bf16.msra.mxu0 0
          %844 = vmatprep.subr.bf16.mxu0 0
          %845 = vmatpush1.bf16.msra.mxu0 0
          %846 = vmatprep.subr.bf16.mxu0 0
          %847 = vmatpush1.bf16.msra.mxu0 0
          %848 = vmatprep.subr.bf16.mxu0 0
          %849 = vmatpush1.bf16.msra.mxu0 0
          %850 = vmatprep.subr.bf16.mxu0 0
          %851 = vmatpush1.bf16.msra.mxu0 0
          %852 = vmatprep.subr.bf16.mxu0 0
          %853 = vmatpush1.bf16.msra.mxu0 0
          %854 = vmatprep.subr.bf16.mxu0 0
          %855 = vmatpush1.bf16.msra.mxu0 0
          %856 = vmatprep.subr.bf16.mxu0 0
          %857 = vmatpush1.bf16.msra.mxu0 0
          %858 = vmatprep.subr.bf16.mxu0 0
          %859 = vmatpush1.bf16.msra.mxu0 0
          %860 = vmatprep.subr.bf16.mxu0 0
          %861 = vmatpush1.bf16.msra.mxu0 0
          %862 = vmatprep.mubr.bf16.mxu0 0
          %863 = vmatmul.mubr.bf16.gmra.mrb[0].mxu0 %v825
          %v864 = vpop.f32.mrb[0].mxu0
          %v865 = vadd.f32 0.0, %v864
          %v866 = vpop.f32.mrb[0].mxu0
          %v867 = vpop.f32.mrb[0].mxu0
          %v868 = vpop.f32.mrb[0].mxu0
          %869 = vdwg.mxu0
          %v870 = vadd.f32 %v819, %v865
          %871 = vst.msk [vmem:[%s812] sm:$0xff] %vm601, %v870
          %872 = vst.msk [vmem:[%s787] sm:$0xff] %vm671, %v792
          %v873 = vld [vmem:[#allocation2] sm:$0xf]
          %v875 = vunpack.c.l.b16 %v873
          %v876 = vpack.c.b16 %v875, %v875
          %877 = vrot.lane.b32.xlu0 %v876, 112
          %v878 = vpop.permute.xlu0 %877
          %879 = vrot.lane.b32.xlu0 %v531, 112
          %v880 = vpop.permute.xlu0 %879
          %v882 = vsel %vm601, %v878, 0
          %v885 = vsel %vm601, %v880, 0
          %887 = vmatprep.subr.bf16.mxu0 0
          %888 = vmatpush1.bf16.xpose.msra.mxu0 %v885
          %889 = vmatprep.subr.bf16.mxu0 0
          %890 = vmatpush1.bf16.xpose.msra.mxu0 0
          %891 = vmatprep.subr.bf16.mxu0 0
          %892 = vmatpush1.bf16.xpose.msra.mxu0 0
          %893 = vmatprep.subr.bf16.mxu0 0
          %894 = vmatpush1.bf16.xpose.msra.mxu0 0
          %895 = vmatprep.subr.bf16.mxu0 0
          %896 = vmatpush1.bf16.xpose.msra.mxu0 0
          %897 = vmatprep.subr.bf16.mxu0 0
          %898 = vmatpush1.bf16.xpose.msra.mxu0 0
          %899 = vmatprep.subr.bf16.mxu0 0
          %900 = vmatpush1.bf16.xpose.msra.mxu0 0
          %901 = vmatprep.subr.bf16.mxu0 0
          %902 = vmatpush1.bf16.xpose.msra.mxu0 0
          %903 = vmatprep.subr.bf16.mxu0 0
          %904 = vmatpush1.bf16.xpose.msra.mxu0 0
          %905 = vmatprep.subr.bf16.mxu0 0
          %906 = vmatpush1.bf16.xpose.msra.mxu0 0
          %907 = vmatprep.subr.bf16.mxu0 0
          %908 = vmatpush1.bf16.xpose.msra.mxu0 0
          %909 = vmatprep.subr.bf16.mxu0 0
          %910 = vmatpush1.bf16.xpose.msra.mxu0 0
          %911 = vmatprep.subr.bf16.mxu0 0
          %912 = vmatpush1.bf16.xpose.msra.mxu0 0
          %913 = vmatprep.subr.bf16.mxu0 0
          %914 = vmatpush1.bf16.xpose.msra.mxu0 0
          %915 = vmatprep.subr.bf16.mxu0 0
          %916 = vmatpush1.bf16.xpose.msra.mxu0 0
          %917 = vmatprep.subr.bf16.mxu0 0
          %918 = vmatpush1.bf16.xpose.msra.mxu0 0
          %919 = vmatprep.mubr.bf16.mxu0 0
          %920 = vmatmul.mubr.bf16.gmra.mrb[0].mxu0 %v882
          %v921 = vpop.f32.mrb[0].mxu0
          %v922 = vadd.f32 0.0, %v921
          %v923 = vpop.f32.mrb[0].mxu0
          %v924 = vpop.f32.mrb[0].mxu0
          %v925 = vpop.f32.mrb[0].mxu0
          %926 = vdwg.mxu0
          %v927 = vsel %vm599, %v922, -inf
          %s928 = scalar_lea.vmem [#allocation3], 16
          %v929 = vld [vmem:[%s928] sm:$0xff]
          %v930 = vsel %vm601, %v927, -inf
          %931 = vmax.xlane.f32.xlu0 %v930
          %v932 = vpop.xlane.xlu0 %931
          %v933 = vmax.f32 %v929, %v932
          %v934 = vsub.f32 %v929, %v933
          %v935 = vmul.f32 %v934, 1.442695
          %v936 = vpow.pop %v935
          %938 = vset.pattern.permute.xlu0 0
          %939 = vperm.xlu0 %938, %v933
          %v940 = vpop.permute.xlu0 %939
          %v942 = vsub.f32 %v927, %v940
          %v943 = vmul.f32 %v942, 1.442695
          %v944 = vpow.pop %v943
          %s945 = scalar_lea.vmem [#allocation4], 16
          %v946 = vld [vmem:[%s945] sm:$0xff]
          %v947 = vmul.f32 %v936, %v946
          %v948 = vsel %vm601, %v944, 0.0
          %949 = vadd.xlane.f32.xlu0 %v948
          %v950 = vpop.xlane.xlu0 %949
          %v951 = vadd.f32 %v947, %v950
          %952 = vst.msk [vmem:[%s945] sm:$0xff] %vm671, %v951
          %s953 = scalar_lea.vmem [#allocation5], 16
          %v954 = vld [vmem:[%s953] sm:$0xff]
          %956 = vset.pattern.permute.xlu0 0
          %957 = vperm.xlu0 %956, %v936
          %v958 = vpop.permute.xlu0 %957
          %v960 = vmul.f32 %v958, %v954
          %v961 = vpack.c.bf16 %v944, %v944
          %962 = vrot.lane.b32.xlu0 %v588, 112
          %v963 = vpop.permute.xlu0 %962
          %v965 = vsel %vm601, %v961, 0
          %v968 = vsel %vm684, %v963, 0
          %970 = vmatprep.subr.bf16.mxu0 0
          %971 = vmatpush1.bf16.msra.mxu0 %v968
          %972 = vmatprep.subr.bf16.mxu0 0
          %973 = vmatpush1.bf16.msra.mxu0 0
          %974 = vmatprep.subr.bf16.mxu0 0
          %975 = vmatpush1.bf16.msra.mxu0 0
          %976 = vmatprep.subr.bf16.mxu0 0
          %977 = vmatpush1.bf16.msra.mxu0 0
          %978 = vmatprep.subr.bf16.mxu0 0
          %979 = vmatpush1.bf16.msra.mxu0 0
          %980 = vmatprep.subr.bf16.mxu0 0
          %981 = vmatpush1.bf16.msra.mxu0 0
          %982 = vmatprep.subr.bf16.mxu0 0
          %983 = vmatpush1.bf16.msra.mxu0 0
          %984 = vmatprep.subr.bf16.mxu0 0
          %985 = vmatpush1.bf16.msra.mxu0 0
          %986 = vmatprep.subr.bf16.mxu0 0
          %987 = vmatpush1.bf16.msra.mxu0 0
          %988 = vmatprep.subr.bf16.mxu0 0
          %989 = vmatpush1.bf16.msra.mxu0 0
          %990 = vmatprep.subr.bf16.mxu0 0
          %991 = vmatpush1.bf16.msra.mxu0 0
          %992 = vmatprep.subr.bf16.mxu0 0
          %993 = vmatpush1.bf16.msra.mxu0 0
          %994 = vmatprep.subr.bf16.mxu0 0
          %995 = vmatpush1.bf16.msra.mxu0 0
          %996 = vmatprep.subr.bf16.mxu0 0
          %997 = vmatpush1.bf16.msra.mxu0 0
          %998 = vmatprep.subr.bf16.mxu0 0
          %999 = vmatpush1.bf16.msra.mxu0 0
          %1000 = vmatprep.subr.bf16.mxu0 0
          %1001 = vmatpush1.bf16.msra.mxu0 0
          %1002 = vmatprep.mubr.bf16.mxu0 0
          %1003 = vmatmul.mubr.bf16.gmra.mrb[0].mxu0 %v965
          %v1004 = vpop.f32.mrb[0].mxu0
          %v1005 = vadd.f32 0.0, %v1004
          %v1006 = vpop.f32.mrb[0].mxu0
          %v1007 = vpop.f32.mrb[0].mxu0
          %v1008 = vpop.f32.mrb[0].mxu0
          %1009 = vdwg.mxu0
          %v1010 = vadd.f32 %v960, %v1005
          %1011 = vst.msk [vmem:[%s953] sm:$0xff] %vm601, %v1010
          %1012 = vst.msk [vmem:[%s928] sm:$0xff] %vm671, %v933
          %v1013 = vld [vmem:[#allocation2] sm:$0xf]
          %v1015 = vunpack.c.l.b16 %v1013
          %v1016 = vpack.c.b16 %v1015, %v1015
          %1017 = vrot.lane.b32.xlu0 %v1016, 104
          %v1018 = vpop.permute.xlu0 %1017
          %1019 = vrot.lane.b32.xlu0 %v531, 104
          %v1020 = vpop.permute.xlu0 %1019
          %v1022 = vsel %vm601, %v1018, 0
          %v1025 = vsel %vm601, %v1020, 0
          %1027 = vmatprep.subr.bf16.mxu0 0
          %1028 = vmatpush1.bf16.xpose.msra.mxu0 %v1025
          %1029 = vmatprep.subr.bf16.mxu0 0
          %1030 = vmatpush1.bf16.xpose.msra.mxu0 0
          %1031 = vmatprep.subr.bf16.mxu0 0
          %1032 = vmatpush1.bf16.xpose.msra.mxu0 0
          %1033 = vmatprep.subr.bf16.mxu0 0
          %1034 = vmatpush1.bf16.xpose.msra.mxu0 0
          %1035 = vmatprep.subr.bf16.mxu0 0
          %1036 = vmatpush1.bf16.xpose.msra.mxu0 0
          %1037 = vmatprep.subr.bf16.mxu0 0
          %1038 = vmatpush1.bf16.xpose.msra.mxu0 0
          %1039 = vmatprep.subr.bf16.mxu0 0
          %1040 = vmatpush1.bf16.xpose.msra.mxu0 0
          %1041 = vmatprep.subr.bf16.mxu0 0
          %1042 = vmatpush1.bf16.xpose.msra.mxu0 0
          %1043 = vmatprep.subr.bf16.mxu0 0
          %1044 = vmatpush1.bf16.xpose.msra.mxu0 0
          %1045 = vmatprep.subr.bf16.mxu0 0
          %1046 = vmatpush1.bf16.xpose.msra.mxu0 0
          %1047 = vmatprep.subr.bf16.mxu0 0
          %1048 = vmatpush1.bf16.xpose.msra.mxu0 0
          %1049 = vmatprep.subr.bf16.mxu0 0
          %1050 = vmatpush1.bf16.xpose.msra.mxu0 0
          %1051 = vmatprep.subr.bf16.mxu0 0
          %1052 = vmatpush1.bf16.xpose.msra.mxu0 0
          %1053 = vmatprep.subr.bf16.mxu0 0
          %1054 = vmatpush1.bf16.xpose.msra.mxu0 0
          %1055 = vmatprep.subr.bf16.mxu0 0
          %1056 = vmatpush1.bf16.xpose.msra.mxu0 0
          %1057 = vmatprep.subr.bf16.mxu0 0
          %1058 = vmatpush1.bf16.xpose.msra.mxu0 0
          %1059 = vmatprep.mubr.bf16.mxu0 0
          %1060 = vmatmul.mubr.bf16.gmra.mrb[0].mxu0 %v1022
          %v1061 = vpop.f32.mrb[0].mxu0
          %v1062 = vadd.f32 0.0, %v1061
          %v1063 = vpop.f32.mrb[0].mxu0
          %v1064 = vpop.f32.mrb[0].mxu0
          %v1065 = vpop.f32.mrb[0].mxu0
          %1066 = vdwg.mxu0
          %v1067 = vsel %vm599, %v1062, -inf
          %s1068 = scalar_lea.vmem [#allocation3], 24
          %v1069 = vld [vmem:[%s1068] sm:$0xff]
          %v1070 = vsel %vm601, %v1067, -inf
          %1071 = vmax.xlane.f32.xlu0 %v1070
          %v1072 = vpop.xlane.xlu0 %1071
          %v1073 = vmax.f32 %v1069, %v1072
          %v1074 = vsub.f32 %v1069, %v1073
          %v1075 = vmul.f32 %v1074, 1.442695
          %v1076 = vpow.pop %v1075
          %1078 = vset.pattern.permute.xlu0 0
          %1079 = vperm.xlu0 %1078, %v1073
          %v1080 = vpop.permute.xlu0 %1079
          %v1082 = vsub.f32 %v1067, %v1080
          %v1083 = vmul.f32 %v1082, 1.442695
          %v1084 = vpow.pop %v1083
          %s1085 = scalar_lea.vmem [#allocation4], 24
          %v1086 = vld [vmem:[%s1085] sm:$0xff]
          %v1087 = vmul.f32 %v1076, %v1086
          %v1088 = vsel %vm601, %v1084, 0.0
          %1089 = vadd.xlane.f32.xlu0 %v1088
          %v1090 = vpop.xlane.xlu0 %1089
          %v1091 = vadd.f32 %v1087, %v1090
          %1092 = vst.msk [vmem:[%s1085] sm:$0xff] %vm671, %v1091
          %s1093 = scalar_lea.vmem [#allocation5], 24
          %v1094 = vld [vmem:[%s1093] sm:$0xff]
          %1096 = vset.pattern.permute.xlu0 0
          %1097 = vperm.xlu0 %1096, %v1076
          %v1098 = vpop.permute.xlu0 %1097
          %v1100 = vmul.f32 %v1098, %v1094
          %v1101 = vpack.c.bf16 %v1084, %v1084
          %1102 = vrot.lane.b32.xlu0 %v588, 104
          %v1103 = vpop.permute.xlu0 %1102
          %v1105 = vsel %vm601, %v1101, 0
          %v1108 = vsel %vm684, %v1103, 0
          %1110 = vmatprep.subr.bf16.mxu0 0
          %1111 = vmatpush1.bf16.msra.mxu0 %v1108
          %1112 = vmatprep.subr.bf16.mxu0 0
          %1113 = vmatpush1.bf16.msra.mxu0 0
          %1114 = vmatprep.subr.bf16.mxu0 0
          %1115 = vmatpush1.bf16.msra.mxu0 0
          %1116 = vmatprep.subr.bf16.mxu0 0
          %1117 = vmatpush1.bf16.msra.mxu0 0
          %1118 = vmatprep.subr.bf16.mxu0 0
          %1119 = vmatpush1.bf16.msra.mxu0 0
          %1120 = vmatprep.subr.bf16.mxu0 0
          %1121 = vmatpush1.bf16.msra.mxu0 0
          %1122 = vmatprep.subr.bf16.mxu0 0
          %1123 = vmatpush1.bf16.msra.mxu0 0
          %1124 = vmatprep.subr.bf16.mxu0 0
          %1125 = vmatpush1.bf16.msra.mxu0 0
          %1126 = vmatprep.subr.bf16.mxu0 0
          %1127 = vmatpush1.bf16.msra.mxu0 0
          %1128 = vmatprep.subr.bf16.mxu0 0
          %1129 = vmatpush1.bf16.msra.mxu0 0
          %1130 = vmatprep.subr.bf16.mxu0 0
          %1131 = vmatpush1.bf16.msra.mxu0 0
          %1132 = vmatprep.subr.bf16.mxu0 0
          %1133 = vmatpush1.bf16.msra.mxu0 0
          %1134 = vmatprep.subr.bf16.mxu0 0
          %1135 = vmatpush1.bf16.msra.mxu0 0
          %1136 = vmatprep.subr.bf16.mxu0 0
          %1137 = vmatpush1.bf16.msra.mxu0 0
          %1138 = vmatprep.subr.bf16.mxu0 0
          %1139 = vmatpush1.bf16.msra.mxu0 0
          %1140 = vmatprep.subr.bf16.mxu0 0
          %1141 = vmatpush1.bf16.msra.mxu0 0
          %1142 = vmatprep.mubr.bf16.mxu0 0
          %1143 = vmatmul.mubr.bf16.gmra.mrb[0].mxu0 %v1105
          %v1144 = vpop.f32.mrb[0].mxu0
          %v1145 = vadd.f32 0.0, %v1144
          %v1146 = vpop.f32.mrb[0].mxu0
          %v1147 = vpop.f32.mrb[0].mxu0
          %v1148 = vpop.f32.mrb[0].mxu0
          %1149 = vdwg.mxu0
          %v1150 = vadd.f32 %v1100, %v1145
          %1151 = vst.msk [vmem:[%s1093] sm:$0xff] %vm601, %v1150
          %1152 = vst.msk [vmem:[%s1068] sm:$0xff] %vm671, %v1073
        $region72: #{tpu_custom_call.1} parent=43 // pred_fallthru
          _
        %p1153 = scmp.eq.s32.totalorder %s34, %s33
        // Predicated region
        $region73: #{tpu_custom_call.1} parent=43 // pred_check
          %p1154 = pneg %p1153
        $region74: #{tpu_custom_call.1} parent=43 // pred_check_branch
          %1156 = sbr.rel (%p1154) target = $region76
        $region75: #{tpu_custom_call.1} parent=43 // pred_region
          %v1157 = vld [vmem:[#allocation4] sm:$0xff]
          %v1158 = vrcp.pop %v1157
          %v1159 = vld [vmem:[#allocation5] sm:$0xff]
          %1161 = vset.pattern.permute.xlu0 0
          %1162 = vperm.xlu0 %1161, %v1158
          %v1163 = vpop.permute.xlu0 %1162
          %v1165 = vmul.f32 %v1159, %v1163
          %v1166 = vpack.c.bf16 %v1165, %v1165
          %vm1167 = vcmask 60416
          %1168 = vst.msk [vmem:[#allocation2] sm:$0xf] %vm1167, %v1166
          %s1169 = scalar_lea.vmem [#allocation4], 8
          %v1170 = vld [vmem:[%s1169] sm:$0xff]
          %v1171 = vrcp.pop %v1170
          %s1172 = scalar_lea.vmem [#allocation5], 8
          %v1173 = vld [vmem:[%s1172] sm:$0xff]
          %1175 = vset.pattern.permute.xlu0 0
          %1176 = vperm.xlu0 %1175, %v1171
          %v1177 = vpop.permute.xlu0 %1176
          %v1179 = vmul.f32 %v1173, %v1177
          %v1180 = vpack.c.bf16 %v1179, %v1179
          %v1182 = vunpack.c.l.b16 %v1180
          %v1183 = vpack.c.b16 %v1182, %v1182
          %1184 = vrot.lane.b32.xlu0 %v1183, 8
          %v1185 = vpop.permute.xlu0 %1184
          %vm1187 = vcmask 126016
          %1188 = vst.msk [vmem:[#allocation2] sm:$0xf] %vm1187, %v1185
          %s1189 = scalar_lea.vmem [#allocation4], 16
          %v1190 = vld [vmem:[%s1189] sm:$0xff]
          %v1191 = vrcp.pop %v1190
          %s1192 = scalar_lea.vmem [#allocation5], 16
          %v1193 = vld [vmem:[%s1192] sm:$0xff]
          %1195 = vset.pattern.permute.xlu0 0
          %1196 = vperm.xlu0 %1195, %v1191
          %v1197 = vpop.permute.xlu0 %1196
          %v1199 = vmul.f32 %v1193, %v1197
          %v1200 = vpack.c.bf16 %v1199, %v1199
          %v1202 = vunpack.c.l.b16 %v1200
          %v1203 = vpack.c.b16 %v1202, %v1202
          %1204 = vrot.lane.b32.xlu0 %v1203, 16
          %v1205 = vpop.permute.xlu0 %1204
          %vm1207 = vcmask 191616
          %1208 = vst.msk [vmem:[#allocation2] sm:$0xf] %vm1207, %v1205
          %s1209 = scalar_lea.vmem [#allocation4], 24
          %v1210 = vld [vmem:[%s1209] sm:$0xff]
          %v1211 = vrcp.pop %v1210
          %s1212 = scalar_lea.vmem [#allocation5], 24
          %v1213 = vld [vmem:[%s1212] sm:$0xff]
          %1215 = vset.pattern.permute.xlu0 0
          %1216 = vperm.xlu0 %1215, %v1211
          %v1217 = vpop.permute.xlu0 %1216
          %v1219 = vmul.f32 %v1213, %v1217
          %v1220 = vpack.c.bf16 %v1219, %v1219
          %v1222 = vunpack.c.l.b16 %v1220
          %v1223 = vpack.c.b16 %v1222, %v1222
          %1224 = vrot.lane.b32.xlu0 %v1223, 24
          %v1225 = vpop.permute.xlu0 %1224
          %vm1227 = vcmask 257216
          %1228 = vst.msk [vmem:[#allocation2] sm:$0xf] %vm1227, %v1225
          %v1229 = vld [vmem:[#allocation2] sm:$0xf]
          %v1230 = vld [vmem:[%s5] sm:$0xf]
          %v1231 = vld [vmem:[%s5 + $0x4] sm:$0xf]
          %v1232 = vld [vmem:[%s5 + $0x8] sm:$0xf]
          %v1233 = vld [vmem:[%s5 + $0xc] sm:$0xf]
          %v1238 = vunpack.c.l.b16 %v1230
          %v1239 = vunpack.c.l.b16 %v1231
          %v1240 = vunpack.c.l.b16 %v1232
          %v1241 = vunpack.c.l.b16 %v1233
          %v1242 = vpack.c.b16 %v1239, %v1238
          %v1243 = vpack.c.b16 %v1241, %v1240
          %vm1246 = vcmask 261120
          %v1248 = vsel %vm1246, %v1229, 0
          %1250 = vmatprep.subr.bf16.mxu0 0
          %1251 = vmatpush1.bf16.msra.mxu0 %v1242
          %1252 = vmatprep.subr.bf16.mxu0 0
          %1253 = vmatpush1.bf16.msra.mxu0 %v1243
          %1254 = vmatprep.subr.bf16.mxu0 0
          %1255 = vmatpush1.bf16.msra.mxu0 0
          %1256 = vmatprep.subr.bf16.mxu0 0
          %1257 = vmatpush1.bf16.msra.mxu0 0
          %1258 = vmatprep.subr.bf16.mxu0 0
          %1259 = vmatpush1.bf16.msra.mxu0 0
          %1260 = vmatprep.subr.bf16.mxu0 0
          %1261 = vmatpush1.bf16.msra.mxu0 0
          %1262 = vmatprep.subr.bf16.mxu0 0
          %1263 = vmatpush1.bf16.msra.mxu0 0
          %1264 = vmatprep.subr.bf16.mxu0 0
          %1265 = vmatpush1.bf16.msra.mxu0 0
          %1266 = vmatprep.subr.bf16.mxu0 0
          %1267 = vmatpush1.bf16.msra.mxu0 0
          %1268 = vmatprep.subr.bf16.mxu0 0
          %1269 = vmatpush1.bf16.msra.mxu0 0
          %1270 = vmatprep.subr.bf16.mxu0 0
          %1271 = vmatpush1.bf16.msra.mxu0 0
          %1272 = vmatprep.subr.bf16.mxu0 0
          %1273 = vmatpush1.bf16.msra.mxu0 0
          %1274 = vmatprep.subr.bf16.mxu0 0
          %1275 = vmatpush1.bf16.msra.mxu0 0
          %1276 = vmatprep.subr.bf16.mxu0 0
          %1277 = vmatpush1.bf16.msra.mxu0 0
          %1278 = vmatprep.subr.bf16.mxu0 0
          %1279 = vmatpush1.bf16.msra.mxu0 0
          %1280 = vmatprep.subr.bf16.mxu0 0
          %1281 = vmatpush1.bf16.msra.mxu0 0
          %1282 = vmatprep.mubr.bf16.mxu0 0
          %1283 = vmatmul.mubr.bf16.gmra.mrb[0].mxu0 %v1248
          %v1284 = vpop.f32.mrb[0].mxu0
          %v1285 = vadd.f32 0.0, %v1284
          %v1286 = vpop.f32.mrb[0].mxu0
          %v1287 = vpop.f32.mrb[0].mxu0
          %v1288 = vpop.f32.mrb[0].mxu0
          %1289 = vdwg.mxu0
          %1290 = vst.msk [vmem:[%s379] sm:$0xff] %vm1246, %v1285
        $region76: #{tpu_custom_call.1} parent=43 // pred_fallthru
          _
        %s1291 = sand.u32 %s200, 1
        %s1292 = scalar_lea.sflag [#allocation8], %s1291
        %s1293 = sand.u32 %s200, 1
        %s1294 = smul.addr %s1293, 8
        %s1295 = scalar_lea.vmem [#allocation15], %s1294
        // Predicated region
        $region77: #{tpu_custom_call.1} parent=43 // pred_check
          %p1296 = pneg %p210
        $region78: #{tpu_custom_call.1} parent=43 // pred_check_branch
          %1298 = sbr.rel (%p1296) target = $region80
        $region79: #{tpu_custom_call.1} parent=43 // pred_region
          %s1300 = ssub.s32 128, 128
          %1301 = vsyncadd %s1292, %s1300
          %s1302 = sadd.s32 %s33, %s32
          %s1303 = smul.addr %s1302, 128
          %s1304 = scalar_lea.hbm %s6, %s1303
          %s1306 = sshll.u32 %s1295, 4
          %s1307 = int_to_ptr.vmem [resolvable:$true] %s1306
          %1309 = dma.vmem_to_hbm [thread:$0]  %s1307, 128, %s1304, %s1292
        $region80: #{tpu_custom_call.1} parent=43 // pred_fallthru
          _
      $region44: #{tpu_custom_call.1} parent=5 // pred_fallthru
        _
      %p1310 = scmp.le.s32.totalorder 2, %s22
      // Predicated region
      $region81: #{tpu_custom_call.1} parent=5 // pred_check
        %p1311 = pneg %p1310
      $region82: #{tpu_custom_call.1} parent=5 // pred_check_branch
        %1313 = sbr.rel (%p1311) target = $region84
      $region83: #{tpu_custom_call.1} parent=5 // pred_region
        %s1314 = ssub.s32 %s22, 2
        // Predicated region
        $region85: #{tpu_custom_call.1} parent=83 // pred_check
          %p1315 = pneg %p216
        $region86: #{tpu_custom_call.1} parent=83 // pred_check_branch
          %1317 = sbr.rel (%p1315) target = $region88
        $region87: #{tpu_custom_call.1} parent=83 // pred_region
          %s1318 = sand.u32 %s201, 1
          %s1319 = scalar_lea.sflag [#allocation8], %s1318
          %s1320 = sand.u32 %s201, 1
          %s1321 = smul.addr %s1320, 8
          %s1322 = scalar_lea.vmem [#allocation15], %s1321
          %1323 = dma.done %s1319, 128
        $region88: #{tpu_custom_call.1} parent=83 // pred_fallthru
          _
      $region84: #{tpu_custom_call.1} parent=5 // pred_fallthru
        _
    $region6: #{tpu_custom_call.1} parent=1 // loop_footer
      %s26 = sadd.s32 1, %s22
    $region7: #{tpu_custom_call.1} parent=1 // loop_footer_branch
      %21 = sbr.rel target = $region3
    $region8: #{tpu_custom_call.1} parent=1 // loop_exit
      _
    %1324 = vsyncpa [#allocation7], 1
    %s1325 = scalar_lea.sflag [#allocation7], 1
    %1326 = vsyncpa %s1325, 1
    %1327 = vsyncpa [#allocation10], 1
    %s1328 = scalar_lea.sflag [#allocation10], 1
    %1329 = vsyncpa %s1328, 1
    %1330 = vsyncpa [#allocation13], 1
    %1331 = vsyncpa [#allocation8], 1
    %s1332 = scalar_lea.sflag [#allocation8], 1
    %1333 = vsyncpa %s1332, 1

</llo_original>
